<compile_context>
chip_gen: v5e
topology: v5e:2x2
jax: 0.10.0
libtpu: 0.0.40
codegen_flags: <defaults>
</compile_context>

<pallas_src>
import functools

import jax
import jax.numpy as jnp
from jax.experimental import pallas as pl
from jax.experimental.pallas import tpu as pltpu  # noqa: F401  (kept for scaling notes below)


# ----------------------------------------------------------------------------
# Fused kernel: num_layers LSTM layers (wavefront) + collapsed linear head.
# PyTorch gate order: i, f, g, o ; c = f*c + i*g ; h = o*tanh(c)
# ----------------------------------------------------------------------------
def fused_forward_kernel(num_layers, T, B, H, *refs):
    """refs = [x_ref,                                  # (T*B, in_0)
               (w_ih_t, w_hh_t, bias) * num_layers,    # (in,4H), (H,4H), (1,4H)
               wfc, bfc,                               # collapsed head: (H,2),(1,2)
               out_ref]                                # (T*B, 2)
    """
    f32 = jnp.float32
    x_ref = refs[0]
    layer_refs = [tuple(refs[1 + 3 * l: 4 + 3 * l]) for l in range(num_layers)]
    wfc_ref = refs[1 + 3 * num_layers]
    bfc_ref = refs[2 + 3 * num_layers]
    out_ref = refs[3 + 3 * num_layers]

    # ---- hoisted, off the serial path -------------------------------------
    # Layer-0 input projection + bias for the whole sequence: one big-M matmul.
    wih0_ref, _, b0_ref = layer_refs[0]
    x = x_ref[...].astype(f32)                                   # (T*B, in_0)
    xproj0 = (jnp.dot(x, wih0_ref[...], preferred_element_type=f32)
              + b0_ref[...])                                     # (T*B, 4H)

    # Per-layer weights loaded once into vregs.
    whh = [layer_refs[l][1][...] for l in range(num_layers)]     # (H, 4H)
    wih = [None] + [layer_refs[l][0][...] for l in range(1, num_layers)]
    bias = [None] + [layer_refs[l][2][...] for l in range(1, num_layers)]

    # Lane-index mask, hoisted: lanes [2H, 3H) are the "g" gate (tanh),
    # all other gate lanes use sigmoid.
    lane = jax.lax.broadcasted_iota(jnp.int32, (B, 4 * H), 1)
    g_gate_mask = (lane >= 2 * H) & (lane < 3 * H)

    def lstm_cell(gates, c_prev):
        # Two full-width EUP passes + mask blend (exact) instead of 4 sliced
        # per-gate activations.
        sig_all = jax.nn.sigmoid(gates)
        tanh_all = jnp.tanh(gates)
        act = jnp.where(g_gate_mask, tanh_all, sig_all)          # (B, 4H)
        i_g = act[:, 0 * H:1 * H]
        f_g = act[:, 1 * H:2 * H]
        g_g = act[:, 2 * H:3 * H]
        o_g = act[:, 3 * H:4 * H]
        c = f_g * c_prev + i_g * g_g
        h = o_g * jnp.tanh(c)
        return h, c

    # ---- wavefront recurrence ----------------------------------------------
    # At wavefront step w, layer l advances time t = w - l, so layer l+1
    # consumes h_{l,t} immediately after it is produced.  Dependent chain:
    # T + num_layers - 1 cell steps (vs num_layers*T when layer-major).
    # T/num_layers are small & static -> fully unrolled (static offsets only).
    h_state = [jnp.zeros((B, H), f32) for _ in range(num_layers)]
    c_state = [jnp.zeros((B, H), f32) for _ in range(num_layers)]
    h_seq = [[None] * T for _ in range(num_layers)]

    for w in range(T + num_layers - 1):
        for l in range(num_layers):
            t = w - l
            if not (0 <= t < T):
                continue
            if l == 0:
                gin = xproj0[t * B:(t + 1) * B, :]               # (B, 4H)
            else:
                gin = (jnp.dot(h_seq[l - 1][t], wih[l],
                               preferred_element_type=f32) + bias[l])
            gates = gin + jnp.dot(h_state[l], whh[l],
                                  preferred_element_type=f32)    # (B, 4H)
            h, c = lstm_cell(gates, c_state[l])
            h_state[l], c_state[l] = h, c
            h_seq[l][t] = h
        # TODO(synk): inter-layer dropout (p=0.2) of nn.LSTM skipped
        # (eval-mode semantics).

    # ---- epilogue: collapsed FC head ---------------------------------------
    # fc3(fc2(fc1(x))) == x @ (w1 w2 w3) + b_eff — one matmul.  h_seq never
    # touched VMEM; concatenate the vreg-resident steps once here.
    cur = jnp.concatenate(h_seq[-1], axis=0)                     # (T*B, H)
    out_ref[...] = (jnp.dot(cur, wfc_ref[...], preferred_element_type=f32)
                    + bfc_ref[...]).astype(out_ref.dtype)


# ----------------------------------------------------------------------------
# Parameter init (weights stored pre-transposed: (in, 4H) / (H, 4H))
# ----------------------------------------------------------------------------
def init_params(key, input_size, hidden_size, num_layers):
    params = {"lstm": []}
    k = 1.0 / jnp.sqrt(hidden_size)
    keys = jax.random.split(key, num_layers * 4 + 6)
    ki = 0
    for layer in range(num_layers):
        in_sz = input_size if layer == 0 else hidden_size
        w_ih_t = jax.random.uniform(keys[ki], (in_sz, 4 * hidden_size),
                                    jnp.float32, -k, k); ki += 1
        w_hh_t = jax.random.uniform(keys[ki], (hidden_size, 4 * hidden_size),
                                    jnp.float32, -k, k); ki += 1
        b_ih = jax.random.uniform(keys[ki], (4 * hidden_size,), jnp.float32, -k, k); ki += 1
        b_hh = jax.random.uniform(keys[ki], (4 * hidden_size,), jnp.float32, -k, k); ki += 1
        params["lstm"].append((w_ih_t, w_hh_t, b_ih, b_hh))

    def linear_init(kw, kb, fan_in, fan_out):
        bound = 1.0 / jnp.sqrt(fan_in)
        w = jax.random.uniform(kw, (fan_in, fan_out), jnp.float32, -bound, bound)
        b = jax.random.uniform(kb, (fan_out,), jnp.float32, -bound, bound)
        return w, b

    params["fc1"] = linear_init(keys[ki], keys[ki + 1], hidden_size, 128); ki += 2
    params["fc2"] = linear_init(keys[ki], keys[ki + 1], 128, 64); ki += 2
    params["fc3"] = linear_init(keys[ki], keys[ki + 1], 64, 2); ki += 2
    return params


# ----------------------------------------------------------------------------
# Full model: LSTM_Trainer.forward (single fused pallas_call)
# ----------------------------------------------------------------------------
@jax.jit
def lstm_trainer_forward(params, xyz):
    # xyz: (T, B, input_size)  — PyTorch nn.LSTM default layout.
    T, B, I = xyz.shape
    lstm_params = params["lstm"]
    num_layers = len(lstm_params)
    H = lstm_params[0][1].shape[0]             # w_hh_t is (H, 4H)

    # Algebraic collapse of the linear head (exact in real arithmetic; the
    # module has no nonlinearities between fc1/fc2/fc3).
    w1, b1 = params["fc1"]
    w2, b2 = params["fc2"]
    w3, b3 = params["fc3"]
    wfc = w1 @ w2 @ w3                         # (H, 2)
    bfc = ((b1 @ w2 + b2) @ w3 + b3).reshape(1, -1)
    out_dim = wfc.shape[1]

    # Pad batch up to the 8-sublane width so every per-timestep slice inside
    # the kernel is a full-sublane-tile access (no masked stores / sublane
    # selects on the serial path).  Padded rows are independent (LSTM is
    # per-batch-element) and are sliced off below.
    B_pad = max(8, pl.cdiv(B, 8) * 8)
    if B_pad != B:
        xyz_p = jnp.zeros((T, B_pad, I), xyz.dtype).at[:, :B, :].set(xyz)
    else:
        xyz_p = xyz

    inputs = [xyz_p.reshape(T * B_pad, I)]
    for (w_ih_t, w_hh_t, b_ih, b_hh) in lstm_params:
        inputs += [w_ih_t, w_hh_t, (b_ih + b_hh).reshape(1, -1)]
    inputs += [wfc, bfc]

    # NOTE(scaling): at H=32/T=8 everything fits trivially in VMEM on all
    # generations with the default scoped limit.  If H/T/B are scaled (esp.
    # v7x's 64 MiB VMEM): cast dot operands to bf16 with f32 accumulation,
    # pick H a multiple of 64 (4H % 256 == 0 for the 256-wide v6e/v7x MXU),
    # replace the full unroll with lax.fori_loop(..., unroll=True), and size
    # vmem_limit_bytes to the actual buffers.
    kernel = functools.partial(fused_forward_kernel, num_layers, T, B_pad, H)
    out = pl.pallas_call(
        kernel,
        out_shape=jax.ShapeDtypeStruct((T * B_pad, out_dim), jnp.float32),
    )(*inputs)
    return out.reshape(T, B_pad, out_dim)[:, :B, :]


# ----------------------------------------------------------------------------
# Pure-JAX reference (non-collapsed FC head) for correctness check
# ----------------------------------------------------------------------------
def reference_forward(params, xyz):
    T, B, _ = xyz.shape
    h_seq = xyz
    for (w_ih_t, w_hh_t, b_ih, b_hh) in params["lstm"]:
        H = w_hh_t.shape[0]
        b = b_ih + b_hh

        def step(carry, x_t, w_ih_t=w_ih_t, w_hh_t=w_hh_t, b=b, H=H):
            h_prev, c_prev = carry
            gates = x_t @ w_ih_t + h_prev @ w_hh_t + b
            i = jax.nn.sigmoid(gates[:, 0 * H:1 * H])
            f = jax.nn.sigmoid(gates[:, 1 * H:2 * H])
            g = jnp.tanh(gates[:, 2 * H:3 * H])
            o = jax.nn.sigmoid(gates[:, 3 * H:4 * H])
            c = f * c_prev + i * g
            h = o * jnp.tanh(c)
            return (h, c), h

        init = (jnp.zeros((B, H), jnp.float32), jnp.zeros((B, H), jnp.float32))
        _, h_seq = jax.lax.scan(step, init, h_seq)
    w1, b1 = params["fc1"]
    w2, b2 = params["fc2"]
    w3, b3 = params["fc3"]
    y = h_seq @ w1 + b1
    y = y @ w2 + b2
    y = y @ w3 + b3
    return y


if __name__ == "__main__":
    input_size = 4
    hidden_size = 32
    num_layers = 2
    seq_length = 8
    batch = 2

    key = jax.random.PRNGKey(0)
    pkey, xkey = jax.random.split(key)
    params = init_params(pkey, input_size, hidden_size, num_layers)

    # PyTorch nn.LSTM (batch_first=False): input (seq_len, batch, input_size)
    xyz = jax.random.normal(xkey, (seq_length, batch, input_size), jnp.float32)

    out = lstm_trainer_forward(params, xyz)
    out = jax.block_until_ready(out)

    ref = reference_forward(params, xyz)
    assert out.shape == (seq_length, batch, 2), out.shape
    assert jnp.allclose(out, ref, atol=1e-4, rtol=1e-4), (
        f"max abs err {jnp.max(jnp.abs(out - ref))}")

    print("KERNEL_OK")
</pallas_src>

<mosaic_0001>
module attributes {stable_mosaic.version = 11 : i64} {
  func.func @fused_forward_kernel(%arg0: memref<64x4xf32, #tpu.memory_space<vmem>>, %arg1: memref<4x128xf32, #tpu.memory_space<vmem>>, %arg2: memref<32x128xf32, #tpu.memory_space<vmem>>, %arg3: memref<1x128xf32, #tpu.memory_space<vmem>>, %arg4: memref<32x128xf32, #tpu.memory_space<vmem>>, %arg5: memref<32x128xf32, #tpu.memory_space<vmem>>, %arg6: memref<1x128xf32, #tpu.memory_space<vmem>>, %arg7: memref<32x2xf32, #tpu.memory_space<vmem>>, %arg8: memref<1x2xf32, #tpu.memory_space<vmem>>, %arg9: memref<64x2xf32, #tpu.memory_space<vmem>>) attributes {dimension_semantics = [], scalar_prefetch = 0 : i64, scratch_operands = 0 : i64, tpu.core_type = #tpu.core_type<tc>} {
    %c0 = arith.constant 0 : index
    %c0_0 = arith.constant 0 : index
    %0 = vector.load %arg0[%c0, %c0_0] : memref<64x4xf32, #tpu.memory_space<vmem>>, vector<64x4xf32>
    %c0_1 = arith.constant 0 : index
    %c0_2 = arith.constant 0 : index
    %1 = vector.load %arg1[%c0_1, %c0_2] : memref<4x128xf32, #tpu.memory_space<vmem>>, vector<4x128xf32>
    %cst = arith.constant dense<0.000000e+00> : vector<64x128xf32>
    %2 = tpu.matmul %0, %1, %cst {dimension_numbers = #tpu.dot_dimension_numbers<[1], [0], [0], [1], [0, 0, 1, 1], [], []>} : vector<64x4xf32>, vector<4x128xf32>, vector<64x128xf32> -> vector<64x128xf32>
    %c0_3 = arith.constant 0 : index
    %c0_4 = arith.constant 0 : index
    %3 = vector.load %arg3[%c0_3, %c0_4] : memref<1x128xf32, #tpu.memory_space<vmem>>, vector<1x128xf32>
    %4 = vector.broadcast %3 : vector<1x128xf32> to vector<64x128xf32>
    %5 = arith.addf %2, %4 : vector<64x128xf32>
    %c0_5 = arith.constant 0 : index
    %c0_6 = arith.constant 0 : index
    %6 = vector.load %arg2[%c0_5, %c0_6] : memref<32x128xf32, #tpu.memory_space<vmem>>, vector<32x128xf32>
    %c0_7 = arith.constant 0 : index
    %c0_8 = arith.constant 0 : index
    %7 = vector.load %arg5[%c0_7, %c0_8] : memref<32x128xf32, #tpu.memory_space<vmem>>, vector<32x128xf32>
    %c0_9 = arith.constant 0 : index
    %c0_10 = arith.constant 0 : index
    %8 = vector.load %arg4[%c0_9, %c0_10] : memref<32x128xf32, #tpu.memory_space<vmem>>, vector<32x128xf32>
    %c0_11 = arith.constant 0 : index
    %c0_12 = arith.constant 0 : index
    %9 = vector.load %arg6[%c0_11, %c0_12] : memref<1x128xf32, #tpu.memory_space<vmem>>, vector<1x128xf32>
    %10 = tpu.iota {dimensions = array<i32: 1>} : vector<8x128xi32>
    %c64_i32 = arith.constant 64 : i32
    %11 = vector.broadcast %c64_i32 : i32 to vector<8x128xi32>
    %12 = arith.cmpi sge, %10, %11 : vector<8x128xi32>
    %c96_i32 = arith.constant 96 : i32
    %13 = vector.broadcast %c96_i32 : i32 to vector<8x128xi32>
    %14 = arith.cmpi slt, %10, %13 : vector<8x128xi32>
    %15 = arith.andi %12, %14 : vector<8x128xi1>
    %cst_13 = arith.constant 0.000000e+00 : f32
    %16 = vector.broadcast %cst_13 : f32 to vector<8x32xf32>
    %cst_14 = arith.constant 0.000000e+00 : f32
    %17 = vector.broadcast %cst_14 : f32 to vector<8x32xf32>
    %cst_15 = arith.constant 0.000000e+00 : f32
    %18 = vector.broadcast %cst_15 : f32 to vector<8x32xf32>
    %cst_16 = arith.constant 0.000000e+00 : f32
    %19 = vector.broadcast %cst_16 : f32 to vector<8x32xf32>
    %20 = vector.extract_strided_slice %5 {offsets = [0, 0], sizes = [8, 128], strides = [1, 1]} : vector<64x128xf32> to vector<8x128xf32>
    %cst_17 = arith.constant dense<0.000000e+00> : vector<8x128xf32>
    %21 = tpu.matmul %16, %6, %cst_17 {dimension_numbers = #tpu.dot_dimension_numbers<[1], [0], [0], [1], [0, 0, 1, 1], [], []>} : vector<8x32xf32>, vector<32x128xf32>, vector<8x128xf32> -> vector<8x128xf32>
    %22 = arith.addf %20, %21 : vector<8x128xf32>
    %23 = arith.negf %22 : vector<8x128xf32>
    %24 = math.exp %23 : vector<8x128xf32>
    %cst_18 = arith.constant 1.000000e+00 : f32
    %25 = vector.broadcast %cst_18 : f32 to vector<8x128xf32>
    %26 = arith.addf %25, %24 : vector<8x128xf32>
    %27 = arith.divf %25, %26 : vector<8x128xf32>
    %28 = math.tanh %22 : vector<8x128xf32>
    %29 = arith.select %15, %28, %27 : vector<8x128xi1>, vector<8x128xf32>
    %30 = vector.extract_strided_slice %29 {offsets = [0, 0], sizes = [8, 32], strides = [1, 1]} : vector<8x128xf32> to vector<8x32xf32>
    %31 = vector.extract_strided_slice %29 {offsets = [0, 32], sizes = [8, 32], strides = [1, 1]} : vector<8x128xf32> to vector<8x32xf32>
    %32 = vector.extract_strided_slice %29 {offsets = [0, 64], sizes = [8, 32], strides = [1, 1]} : vector<8x128xf32> to vector<8x32xf32>
    %33 = vector.extract_strided_slice %29 {offsets = [0, 96], sizes = [8, 32], strides = [1, 1]} : vector<8x128xf32> to vector<8x32xf32>
    %34 = arith.mulf %31, %18 : vector<8x32xf32>
    %35 = arith.mulf %30, %32 : vector<8x32xf32>
    %36 = arith.addf %34, %35 : vector<8x32xf32>
    %37 = math.tanh %36 : vector<8x32xf32>
    %38 = arith.mulf %33, %37 : vector<8x32xf32>
    %39 = vector.extract_strided_slice %5 {offsets = [8, 0], sizes = [8, 128], strides = [1, 1]} : vector<64x128xf32> to vector<8x128xf32>
    %cst_19 = arith.constant dense<0.000000e+00> : vector<8x128xf32>
    %40 = tpu.matmul %38, %6, %cst_19 {dimension_numbers = #tpu.dot_dimension_numbers<[1], [0], [0], [1], [0, 0, 1, 1], [], []>} : vector<8x32xf32>, vector<32x128xf32>, vector<8x128xf32> -> vector<8x128xf32>
    %41 = arith.addf %39, %40 : vector<8x128xf32>
    %42 = arith.negf %41 : vector<8x128xf32>
    %43 = math.exp %42 : vector<8x128xf32>
    %cst_20 = arith.constant 1.000000e+00 : f32
    %44 = vector.broadcast %cst_20 : f32 to vector<8x128xf32>
    %45 = arith.addf %44, %43 : vector<8x128xf32>
    %46 = arith.divf %44, %45 : vector<8x128xf32>
    %47 = math.tanh %41 : vector<8x128xf32>
    %48 = arith.select %15, %47, %46 : vector<8x128xi1>, vector<8x128xf32>
    %49 = vector.extract_strided_slice %48 {offsets = [0, 0], sizes = [8, 32], strides = [1, 1]} : vector<8x128xf32> to vector<8x32xf32>
    %50 = vector.extract_strided_slice %48 {offsets = [0, 32], sizes = [8, 32], strides = [1, 1]} : vector<8x128xf32> to vector<8x32xf32>
    %51 = vector.extract_strided_slice %48 {offsets = [0, 64], sizes = [8, 32], strides = [1, 1]} : vector<8x128xf32> to vector<8x32xf32>
    %52 = vector.extract_strided_slice %48 {offsets = [0, 96], sizes = [8, 32], strides = [1, 1]} : vector<8x128xf32> to vector<8x32xf32>
    %53 = arith.mulf %50, %36 : vector<8x32xf32>
    %54 = arith.mulf %49, %51 : vector<8x32xf32>
    %55 = arith.addf %53, %54 : vector<8x32xf32>
    %56 = math.tanh %55 : vector<8x32xf32>
    %57 = arith.mulf %52, %56 : vector<8x32xf32>
    %cst_21 = arith.constant dense<0.000000e+00> : vector<8x128xf32>
    %58 = tpu.matmul %38, %8, %cst_21 {dimension_numbers = #tpu.dot_dimension_numbers<[1], [0], [0], [1], [0, 0, 1, 1], [], []>} : vector<8x32xf32>, vector<32x128xf32>, vector<8x128xf32> -> vector<8x128xf32>
    %59 = vector.broadcast %9 : vector<1x128xf32> to vector<8x128xf32>
    %60 = arith.addf %58, %59 : vector<8x128xf32>
    %cst_22 = arith.constant dense<0.000000e+00> : vector<8x128xf32>
    %61 = tpu.matmul %17, %7, %cst_22 {dimension_numbers = #tpu.dot_dimension_numbers<[1], [0], [0], [1], [0, 0, 1, 1], [], []>} : vector<8x32xf32>, vector<32x128xf32>, vector<8x128xf32> -> vector<8x128xf32>
    %62 = arith.addf %60, %61 : vector<8x128xf32>
    %63 = arith.negf %62 : vector<8x128xf32>
    %64 = math.exp %63 : vector<8x128xf32>
    %cst_23 = arith.constant 1.000000e+00 : f32
    %65 = vector.broadcast %cst_23 : f32 to vector<8x128xf32>
    %66 = arith.addf %65, %64 : vector<8x128xf32>
    %67 = arith.divf %65, %66 : vector<8x128xf32>
    %68 = math.tanh %62 : vector<8x128xf32>
    %69 = arith.select %15, %68, %67 : vector<8x128xi1>, vector<8x128xf32>
    %70 = vector.extract_strided_slice %69 {offsets = [0, 0], sizes = [8, 32], strides = [1, 1]} : vector<8x128xf32> to vector<8x32xf32>
    %71 = vector.extract_strided_slice %69 {offsets = [0, 32], sizes = [8, 32], strides = [1, 1]} : vector<8x128xf32> to vector<8x32xf32>
    %72 = vector.extract_strided_slice %69 {offsets = [0, 64], sizes = [8, 32], strides = [1, 1]} : vector<8x128xf32> to vector<8x32xf32>
    %73 = vector.extract_strided_slice %69 {offsets = [0, 96], sizes = [8, 32], strides = [1, 1]} : vector<8x128xf32> to vector<8x32xf32>
    %74 = arith.mulf %71, %19 : vector<8x32xf32>
    %75 = arith.mulf %70, %72 : vector<8x32xf32>
    %76 = arith.addf %74, %75 : vector<8x32xf32>
    %77 = math.tanh %76 : vector<8x32xf32>
    %78 = arith.mulf %73, %77 : vector<8x32xf32>
    %79 = vector.extract_strided_slice %5 {offsets = [16, 0], sizes = [8, 128], strides = [1, 1]} : vector<64x128xf32> to vector<8x128xf32>
    %cst_24 = arith.constant dense<0.000000e+00> : vector<8x128xf32>
    %80 = tpu.matmul %57, %6, %cst_24 {dimension_numbers = #tpu.dot_dimension_numbers<[1], [0], [0], [1], [0, 0, 1, 1], [], []>} : vector<8x32xf32>, vector<32x128xf32>, vector<8x128xf32> -> vector<8x128xf32>
    %81 = arith.addf %79, %80 : vector<8x128xf32>
    %82 = arith.negf %81 : vector<8x128xf32>
    %83 = math.exp %82 : vector<8x128xf32>
    %cst_25 = arith.constant 1.000000e+00 : f32
    %84 = vector.broadcast %cst_25 : f32 to vector<8x128xf32>
    %85 = arith.addf %84, %83 : vector<8x128xf32>
    %86 = arith.divf %84, %85 : vector<8x128xf32>
    %87 = math.tanh %81 : vector<8x128xf32>
    %88 = arith.select %15, %87, %86 : vector<8x128xi1>, vector<8x128xf32>
    %89 = vector.extract_strided_slice %88 {offsets = [0, 0], sizes = [8, 32], strides = [1, 1]} : vector<8x128xf32> to vector<8x32xf32>
    %90 = vector.extract_strided_slice %88 {offsets = [0, 32], sizes = [8, 32], strides = [1, 1]} : vector<8x128xf32> to vector<8x32xf32>
    %91 = vector.extract_strided_slice %88 {offsets = [0, 64], sizes = [8, 32], strides = [1, 1]} : vector<8x128xf32> to vector<8x32xf32>
    %92 = vector.extract_strided_slice %88 {offsets = [0, 96], sizes = [8, 32], strides = [1, 1]} : vector<8x128xf32> to vector<8x32xf32>
    %93 = arith.mulf %90, %55 : vector<8x32xf32>
    %94 = arith.mulf %89, %91 : vector<8x32xf32>
    %95 = arith.addf %93, %94 : vector<8x32xf32>
    %96 = math.tanh %95 : vector<8x32xf32>
    %97 = arith.mulf %92, %96 : vector<8x32xf32>
    %cst_26 = arith.constant dense<0.000000e+00> : vector<8x128xf32>
    %98 = tpu.matmul %57, %8, %cst_26 {dimension_numbers = #tpu.dot_dimension_numbers<[1], [0], [0], [1], [0, 0, 1, 1], [], []>} : vector<8x32xf32>, vector<32x128xf32>, vector<8x128xf32> -> vector<8x128xf32>
    %99 = vector.broadcast %9 : vector<1x128xf32> to vector<8x128xf32>
    %100 = arith.addf %98, %99 : vector<8x128xf32>
    %cst_27 = arith.constant dense<0.000000e+00> : vector<8x128xf32>
    %101 = tpu.matmul %78, %7, %cst_27 {dimension_numbers = #tpu.dot_dimension_numbers<[1], [0], [0], [1], [0, 0, 1, 1], [], []>} : vector<8x32xf32>, vector<32x128xf32>, vector<8x128xf32> -> vector<8x128xf32>
    %102 = arith.addf %100, %101 : vector<8x128xf32>
    %103 = arith.negf %102 : vector<8x128xf32>
    %104 = math.exp %103 : vector<8x128xf32>
    %cst_28 = arith.constant 1.000000e+00 : f32
    %105 = vector.broadcast %cst_28 : f32 to vector<8x128xf32>
    %106 = arith.addf %105, %104 : vector<8x128xf32>
    %107 = arith.divf %105, %106 : vector<8x128xf32>
    %108 = math.tanh %102 : vector<8x128xf32>
    %109 = arith.select %15, %108, %107 : vector<8x128xi1>, vector<8x128xf32>
    %110 = vector.extract_strided_slice %109 {offsets = [0, 0], sizes = [8, 32], strides = [1, 1]} : vector<8x128xf32> to vector<8x32xf32>
    %111 = vector.extract_strided_slice %109 {offsets = [0, 32], sizes = [8, 32], strides = [1, 1]} : vector<8x128xf32> to vector<8x32xf32>
    %112 = vector.extract_strided_slice %109 {offsets = [0, 64], sizes = [8, 32], strides = [1, 1]} : vector<8x128xf32> to vector<8x32xf32>
    %113 = vector.extract_strided_slice %109 {offsets = [0, 96], sizes = [8, 32], strides = [1, 1]} : vector<8x128xf32> to vector<8x32xf32>
    %114 = arith.mulf %111, %76 : vector<8x32xf32>
    %115 = arith.mulf %110, %112 : vector<8x32xf32>
    %116 = arith.addf %114, %115 : vector<8x32xf32>
    %117 = math.tanh %116 : vector<8x32xf32>
    %118 = arith.mulf %113, %117 : vector<8x32xf32>
    %119 = vector.extract_strided_slice %5 {offsets = [24, 0], sizes = [8, 128], strides = [1, 1]} : vector<64x128xf32> to vector<8x128xf32>
    %cst_29 = arith.constant dense<0.000000e+00> : vector<8x128xf32>
    %120 = tpu.matmul %97, %6, %cst_29 {dimension_numbers = #tpu.dot_dimension_numbers<[1], [0], [0], [1], [0, 0, 1, 1], [], []>} : vector<8x32xf32>, vector<32x128xf32>, vector<8x128xf32> -> vector<8x128xf32>
    %121 = arith.addf %119, %120 : vector<8x128xf32>
    %122 = arith.negf %121 : vector<8x128xf32>
    %123 = math.exp %122 : vector<8x128xf32>
    %cst_30 = arith.constant 1.000000e+00 : f32
    %124 = vector.broadcast %cst_30 : f32 to vector<8x128xf32>
    %125 = arith.addf %124, %123 : vector<8x128xf32>
    %126 = arith.divf %124, %125 : vector<8x128xf32>
    %127 = math.tanh %121 : vector<8x128xf32>
    %128 = arith.select %15, %127, %126 : vector<8x128xi1>, vector<8x128xf32>
    %129 = vector.extract_strided_slice %128 {offsets = [0, 0], sizes = [8, 32], strides = [1, 1]} : vector<8x128xf32> to vector<8x32xf32>
    %130 = vector.extract_strided_slice %128 {offsets = [0, 32], sizes = [8, 32], strides = [1, 1]} : vector<8x128xf32> to vector<8x32xf32>
    %131 = vector.extract_strided_slice %128 {offsets = [0, 64], sizes = [8, 32], strides = [1, 1]} : vector<8x128xf32> to vector<8x32xf32>
    %132 = vector.extract_strided_slice %128 {offsets = [0, 96], sizes = [8, 32], strides = [1, 1]} : vector<8x128xf32> to vector<8x32xf32>
    %133 = arith.mulf %130, %95 : vector<8x32xf32>
    %134 = arith.mulf %129, %131 : vector<8x32xf32>
    %135 = arith.addf %133, %134 : vector<8x32xf32>
    %136 = math.tanh %135 : vector<8x32xf32>
    %137 = arith.mulf %132, %136 : vector<8x32xf32>
    %cst_31 = arith.constant dense<0.000000e+00> : vector<8x128xf32>
    %138 = tpu.matmul %97, %8, %cst_31 {dimension_numbers = #tpu.dot_dimension_numbers<[1], [0], [0], [1], [0, 0, 1, 1], [], []>} : vector<8x32xf32>, vector<32x128xf32>, vector<8x128xf32> -> vector<8x128xf32>
    %139 = vector.broadcast %9 : vector<1x128xf32> to vector<8x128xf32>
    %140 = arith.addf %138, %139 : vector<8x128xf32>
    %cst_32 = arith.constant dense<0.000000e+00> : vector<8x128xf32>
    %141 = tpu.matmul %118, %7, %cst_32 {dimension_numbers = #tpu.dot_dimension_numbers<[1], [0], [0], [1], [0, 0, 1, 1], [], []>} : vector<8x32xf32>, vector<32x128xf32>, vector<8x128xf32> -> vector<8x128xf32>
    %142 = arith.addf %140, %141 : vector<8x128xf32>
    %143 = arith.negf %142 : vector<8x128xf32>
    %144 = math.exp %143 : vector<8x128xf32>
    %cst_33 = arith.constant 1.000000e+00 : f32
    %145 = vector.broadcast %cst_33 : f32 to vector<8x128xf32>
    %146 = arith.addf %145, %144 : vector<8x128xf32>
    %147 = arith.divf %145, %146 : vector<8x128xf32>
    %148 = math.tanh %142 : vector<8x128xf32>
    %149 = arith.select %15, %148, %147 : vector<8x128xi1>, vector<8x128xf32>
    %150 = vector.extract_strided_slice %149 {offsets = [0, 0], sizes = [8, 32], strides = [1, 1]} : vector<8x128xf32> to vector<8x32xf32>
    %151 = vector.extract_strided_slice %149 {offsets = [0, 32], sizes = [8, 32], strides = [1, 1]} : vector<8x128xf32> to vector<8x32xf32>
    %152 = vector.extract_strided_slice %149 {offsets = [0, 64], sizes = [8, 32], strides = [1, 1]} : vector<8x128xf32> to vector<8x32xf32>
    %153 = vector.extract_strided_slice %149 {offsets = [0, 96], sizes = [8, 32], strides = [1, 1]} : vector<8x128xf32> to vector<8x32xf32>
    %154 = arith.mulf %151, %116 : vector<8x32xf32>
    %155 = arith.mulf %150, %152 : vector<8x32xf32>
    %156 = arith.addf %154, %155 : vector<8x32xf32>
    %157 = math.tanh %156 : vector<8x32xf32>
    %158 = arith.mulf %153, %157 : vector<8x32xf32>
    %159 = vector.extract_strided_slice %5 {offsets = [32, 0], sizes = [8, 128], strides = [1, 1]} : vector<64x128xf32> to vector<8x128xf32>
    %cst_34 = arith.constant dense<0.000000e+00> : vector<8x128xf32>
    %160 = tpu.matmul %137, %6, %cst_34 {dimension_numbers = #tpu.dot_dimension_numbers<[1], [0], [0], [1], [0, 0, 1, 1], [], []>} : vector<8x32xf32>, vector<32x128xf32>, vector<8x128xf32> -> vector<8x128xf32>
    %161 = arith.addf %159, %160 : vector<8x128xf32>
    %162 = arith.negf %161 : vector<8x128xf32>
    %163 = math.exp %162 : vector<8x128xf32>
    %cst_35 = arith.constant 1.000000e+00 : f32
    %164 = vector.broadcast %cst_35 : f32 to vector<8x128xf32>
    %165 = arith.addf %164, %163 : vector<8x128xf32>
    %166 = arith.divf %164, %165 : vector<8x128xf32>
    %167 = math.tanh %161 : vector<8x128xf32>
    %168 = arith.select %15, %167, %166 : vector<8x128xi1>, vector<8x128xf32>
    %169 = vector.extract_strided_slice %168 {offsets = [0, 0], sizes = [8, 32], strides = [1, 1]} : vector<8x128xf32> to vector<8x32xf32>
    %170 = vector.extract_strided_slice %168 {offsets = [0, 32], sizes = [8, 32], strides = [1, 1]} : vector<8x128xf32> to vector<8x32xf32>
    %171 = vector.extract_strided_slice %168 {offsets = [0, 64], sizes = [8, 32], strides = [1, 1]} : vector<8x128xf32> to vector<8x32xf32>
    %172 = vector.extract_strided_slice %168 {offsets = [0, 96], sizes = [8, 32], strides = [1, 1]} : vector<8x128xf32> to vector<8x32xf32>
    %173 = arith.mulf %170, %135 : vector<8x32xf32>
    %174 = arith.mulf %169, %171 : vector<8x32xf32>
    %175 = arith.addf %173, %174 : vector<8x32xf32>
    %176 = math.tanh %175 : vector<8x32xf32>
    %177 = arith.mulf %172, %176 : vector<8x32xf32>
    %cst_36 = arith.constant dense<0.000000e+00> : vector<8x128xf32>
    %178 = tpu.matmul %137, %8, %cst_36 {dimension_numbers = #tpu.dot_dimension_numbers<[1], [0], [0], [1], [0, 0, 1, 1], [], []>} : vector<8x32xf32>, vector<32x128xf32>, vector<8x128xf32> -> vector<8x128xf32>
    %179 = vector.broadcast %9 : vector<1x128xf32> to vector<8x128xf32>
    %180 = arith.addf %178, %179 : vector<8x128xf32>
    %cst_37 = arith.constant dense<0.000000e+00> : vector<8x128xf32>
    %181 = tpu.matmul %158, %7, %cst_37 {dimension_numbers = #tpu.dot_dimension_numbers<[1], [0], [0], [1], [0, 0, 1, 1], [], []>} : vector<8x32xf32>, vector<32x128xf32>, vector<8x128xf32> -> vector<8x128xf32>
    %182 = arith.addf %180, %181 : vector<8x128xf32>
    %183 = arith.negf %182 : vector<8x128xf32>
    %184 = math.exp %183 : vector<8x128xf32>
    %cst_38 = arith.constant 1.000000e+00 : f32
    %185 = vector.broadcast %cst_38 : f32 to vector<8x128xf32>
    %186 = arith.addf %185, %184 : vector<8x128xf32>
    %187 = arith.divf %185, %186 : vector<8x128xf32>
    %188 = math.tanh %182 : vector<8x128xf32>
    %189 = arith.select %15, %188, %187 : vector<8x128xi1>, vector<8x128xf32>
    %190 = vector.extract_strided_slice %189 {offsets = [0, 0], sizes = [8, 32], strides = [1, 1]} : vector<8x128xf32> to vector<8x32xf32>
    %191 = vector.extract_strided_slice %189 {offsets = [0, 32], sizes = [8, 32], strides = [1, 1]} : vector<8x128xf32> to vector<8x32xf32>
    %192 = vector.extract_strided_slice %189 {offsets = [0, 64], sizes = [8, 32], strides = [1, 1]} : vector<8x128xf32> to vector<8x32xf32>
    %193 = vector.extract_strided_slice %189 {offsets = [0, 96], sizes = [8, 32], strides = [1, 1]} : vector<8x128xf32> to vector<8x32xf32>
    %194 = arith.mulf %191, %156 : vector<8x32xf32>
    %195 = arith.mulf %190, %192 : vector<8x32xf32>
    %196 = arith.addf %194, %195 : vector<8x32xf32>
    %197 = math.tanh %196 : vector<8x32xf32>
    %198 = arith.mulf %193, %197 : vector<8x32xf32>
    %199 = vector.extract_strided_slice %5 {offsets = [40, 0], sizes = [8, 128], strides = [1, 1]} : vector<64x128xf32> to vector<8x128xf32>
    %cst_39 = arith.constant dense<0.000000e+00> : vector<8x128xf32>
    %200 = tpu.matmul %177, %6, %cst_39 {dimension_numbers = #tpu.dot_dimension_numbers<[1], [0], [0], [1], [0, 0, 1, 1], [], []>} : vector<8x32xf32>, vector<32x128xf32>, vector<8x128xf32> -> vector<8x128xf32>
    %201 = arith.addf %199, %200 : vector<8x128xf32>
    %202 = arith.negf %201 : vector<8x128xf32>
    %203 = math.exp %202 : vector<8x128xf32>
    %cst_40 = arith.constant 1.000000e+00 : f32
    %204 = vector.broadcast %cst_40 : f32 to vector<8x128xf32>
    %205 = arith.addf %204, %203 : vector<8x128xf32>
    %206 = arith.divf %204, %205 : vector<8x128xf32>
    %207 = math.tanh %201 : vector<8x128xf32>
    %208 = arith.select %15, %207, %206 : vector<8x128xi1>, vector<8x128xf32>
    %209 = vector.extract_strided_slice %208 {offsets = [0, 0], sizes = [8, 32], strides = [1, 1]} : vector<8x128xf32> to vector<8x32xf32>
    %210 = vector.extract_strided_slice %208 {offsets = [0, 32], sizes = [8, 32], strides = [1, 1]} : vector<8x128xf32> to vector<8x32xf32>
    %211 = vector.extract_strided_slice %208 {offsets = [0, 64], sizes = [8, 32], strides = [1, 1]} : vector<8x128xf32> to vector<8x32xf32>
    %212 = vector.extract_strided_slice %208 {offsets = [0, 96], sizes = [8, 32], strides = [1, 1]} : vector<8x128xf32> to vector<8x32xf32>
    %213 = arith.mulf %210, %175 : vector<8x32xf32>
    %214 = arith.mulf %209, %211 : vector<8x32xf32>
    %215 = arith.addf %213, %214 : vector<8x32xf32>
    %216 = math.tanh %215 : vector<8x32xf32>
    %217 = arith.mulf %212, %216 : vector<8x32xf32>
    %cst_41 = arith.constant dense<0.000000e+00> : vector<8x128xf32>
    %218 = tpu.matmul %177, %8, %cst_41 {dimension_numbers = #tpu.dot_dimension_numbers<[1], [0], [0], [1], [0, 0, 1, 1], [], []>} : vector<8x32xf32>, vector<32x128xf32>, vector<8x128xf32> -> vector<8x128xf32>
    %219 = vector.broadcast %9 : vector<1x128xf32> to vector<8x128xf32>
    %220 = arith.addf %218, %219 : vector<8x128xf32>
    %cst_42 = arith.constant dense<0.000000e+00> : vector<8x128xf32>
    %221 = tpu.matmul %198, %7, %cst_42 {dimension_numbers = #tpu.dot_dimension_numbers<[1], [0], [0], [1], [0, 0, 1, 1], [], []>} : vector<8x32xf32>, vector<32x128xf32>, vector<8x128xf32> -> vector<8x128xf32>
    %222 = arith.addf %220, %221 : vector<8x128xf32>
    %223 = arith.negf %222 : vector<8x128xf32>
    %224 = math.exp %223 : vector<8x128xf32>
    %cst_43 = arith.constant 1.000000e+00 : f32
    %225 = vector.broadcast %cst_43 : f32 to vector<8x128xf32>
    %226 = arith.addf %225, %224 : vector<8x128xf32>
    %227 = arith.divf %225, %226 : vector<8x128xf32>
    %228 = math.tanh %222 : vector<8x128xf32>
    %229 = arith.select %15, %228, %227 : vector<8x128xi1>, vector<8x128xf32>
    %230 = vector.extract_strided_slice %229 {offsets = [0, 0], sizes = [8, 32], strides = [1, 1]} : vector<8x128xf32> to vector<8x32xf32>
    %231 = vector.extract_strided_slice %229 {offsets = [0, 32], sizes = [8, 32], strides = [1, 1]} : vector<8x128xf32> to vector<8x32xf32>
    %232 = vector.extract_strided_slice %229 {offsets = [0, 64], sizes = [8, 32], strides = [1, 1]} : vector<8x128xf32> to vector<8x32xf32>
    %233 = vector.extract_strided_slice %229 {offsets = [0, 96], sizes = [8, 32], strides = [1, 1]} : vector<8x128xf32> to vector<8x32xf32>
    %234 = arith.mulf %231, %196 : vector<8x32xf32>
    %235 = arith.mulf %230, %232 : vector<8x32xf32>
    %236 = arith.addf %234, %235 : vector<8x32xf32>
    %237 = math.tanh %236 : vector<8x32xf32>
    %238 = arith.mulf %233, %237 : vector<8x32xf32>
    %239 = vector.extract_strided_slice %5 {offsets = [48, 0], sizes = [8, 128], strides = [1, 1]} : vector<64x128xf32> to vector<8x128xf32>
    %cst_44 = arith.constant dense<0.000000e+00> : vector<8x128xf32>
    %240 = tpu.matmul %217, %6, %cst_44 {dimension_numbers = #tpu.dot_dimension_numbers<[1], [0], [0], [1], [0, 0, 1, 1], [], []>} : vector<8x32xf32>, vector<32x128xf32>, vector<8x128xf32> -> vector<8x128xf32>
    %241 = arith.addf %239, %240 : vector<8x128xf32>
    %242 = arith.negf %241 : vector<8x128xf32>
    %243 = math.exp %242 : vector<8x128xf32>
    %cst_45 = arith.constant 1.000000e+00 : f32
    %244 = vector.broadcast %cst_45 : f32 to vector<8x128xf32>
    %245 = arith.addf %244, %243 : vector<8x128xf32>
    %246 = arith.divf %244, %245 : vector<8x128xf32>
    %247 = math.tanh %241 : vector<8x128xf32>
    %248 = arith.select %15, %247, %246 : vector<8x128xi1>, vector<8x128xf32>
    %249 = vector.extract_strided_slice %248 {offsets = [0, 0], sizes = [8, 32], strides = [1, 1]} : vector<8x128xf32> to vector<8x32xf32>
    %250 = vector.extract_strided_slice %248 {offsets = [0, 32], sizes = [8, 32], strides = [1, 1]} : vector<8x128xf32> to vector<8x32xf32>
    %251 = vector.extract_strided_slice %248 {offsets = [0, 64], sizes = [8, 32], strides = [1, 1]} : vector<8x128xf32> to vector<8x32xf32>
    %252 = vector.extract_strided_slice %248 {offsets = [0, 96], sizes = [8, 32], strides = [1, 1]} : vector<8x128xf32> to vector<8x32xf32>
    %253 = arith.mulf %250, %215 : vector<8x32xf32>
    %254 = arith.mulf %249, %251 : vector<8x32xf32>
    %255 = arith.addf %253, %254 : vector<8x32xf32>
    %256 = math.tanh %255 : vector<8x32xf32>
    %257 = arith.mulf %252, %256 : vector<8x32xf32>
    %cst_46 = arith.constant dense<0.000000e+00> : vector<8x128xf32>
    %258 = tpu.matmul %217, %8, %cst_46 {dimension_numbers = #tpu.dot_dimension_numbers<[1], [0], [0], [1], [0, 0, 1, 1], [], []>} : vector<8x32xf32>, vector<32x128xf32>, vector<8x128xf32> -> vector<8x128xf32>
    %259 = vector.broadcast %9 : vector<1x128xf32> to vector<8x128xf32>
    %260 = arith.addf %258, %259 : vector<8x128xf32>
    %cst_47 = arith.constant dense<0.000000e+00> : vector<8x128xf32>
    %261 = tpu.matmul %238, %7, %cst_47 {dimension_numbers = #tpu.dot_dimension_numbers<[1], [0], [0], [1], [0, 0, 1, 1], [], []>} : vector<8x32xf32>, vector<32x128xf32>, vector<8x128xf32> -> vector<8x128xf32>
    %262 = arith.addf %260, %261 : vector<8x128xf32>
    %263 = arith.negf %262 : vector<8x128xf32>
    %264 = math.exp %263 : vector<8x128xf32>
    %cst_48 = arith.constant 1.000000e+00 : f32
    %265 = vector.broadcast %cst_48 : f32 to vector<8x128xf32>
    %266 = arith.addf %265, %264 : vector<8x128xf32>
    %267 = arith.divf %265, %266 : vector<8x128xf32>
    %268 = math.tanh %262 : vector<8x128xf32>
    %269 = arith.select %15, %268, %267 : vector<8x128xi1>, vector<8x128xf32>
    %270 = vector.extract_strided_slice %269 {offsets = [0, 0], sizes = [8, 32], strides = [1, 1]} : vector<8x128xf32> to vector<8x32xf32>
    %271 = vector.extract_strided_slice %269 {offsets = [0, 32], sizes = [8, 32], strides = [1, 1]} : vector<8x128xf32> to vector<8x32xf32>
    %272 = vector.extract_strided_slice %269 {offsets = [0, 64], sizes = [8, 32], strides = [1, 1]} : vector<8x128xf32> to vector<8x32xf32>
    %273 = vector.extract_strided_slice %269 {offsets = [0, 96], sizes = [8, 32], strides = [1, 1]} : vector<8x128xf32> to vector<8x32xf32>
    %274 = arith.mulf %271, %236 : vector<8x32xf32>
    %275 = arith.mulf %270, %272 : vector<8x32xf32>
    %276 = arith.addf %274, %275 : vector<8x32xf32>
    %277 = math.tanh %276 : vector<8x32xf32>
    %278 = arith.mulf %273, %277 : vector<8x32xf32>
    %279 = vector.extract_strided_slice %5 {offsets = [56, 0], sizes = [8, 128], strides = [1, 1]} : vector<64x128xf32> to vector<8x128xf32>
    %cst_49 = arith.constant dense<0.000000e+00> : vector<8x128xf32>
    %280 = tpu.matmul %257, %6, %cst_49 {dimension_numbers = #tpu.dot_dimension_numbers<[1], [0], [0], [1], [0, 0, 1, 1], [], []>} : vector<8x32xf32>, vector<32x128xf32>, vector<8x128xf32> -> vector<8x128xf32>
    %281 = arith.addf %279, %280 : vector<8x128xf32>
    %282 = arith.negf %281 : vector<8x128xf32>
    %283 = math.exp %282 : vector<8x128xf32>
    %cst_50 = arith.constant 1.000000e+00 : f32
    %284 = vector.broadcast %cst_50 : f32 to vector<8x128xf32>
    %285 = arith.addf %284, %283 : vector<8x128xf32>
    %286 = arith.divf %284, %285 : vector<8x128xf32>
    %287 = math.tanh %281 : vector<8x128xf32>
    %288 = arith.select %15, %287, %286 : vector<8x128xi1>, vector<8x128xf32>
    %289 = vector.extract_strided_slice %288 {offsets = [0, 0], sizes = [8, 32], strides = [1, 1]} : vector<8x128xf32> to vector<8x32xf32>
    %290 = vector.extract_strided_slice %288 {offsets = [0, 32], sizes = [8, 32], strides = [1, 1]} : vector<8x128xf32> to vector<8x32xf32>
    %291 = vector.extract_strided_slice %288 {offsets = [0, 64], sizes = [8, 32], strides = [1, 1]} : vector<8x128xf32> to vector<8x32xf32>
    %292 = vector.extract_strided_slice %288 {offsets = [0, 96], sizes = [8, 32], strides = [1, 1]} : vector<8x128xf32> to vector<8x32xf32>
    %293 = arith.mulf %290, %255 : vector<8x32xf32>
    %294 = arith.mulf %289, %291 : vector<8x32xf32>
    %295 = arith.addf %293, %294 : vector<8x32xf32>
    %296 = math.tanh %295 : vector<8x32xf32>
    %297 = arith.mulf %292, %296 : vector<8x32xf32>
    %cst_51 = arith.constant dense<0.000000e+00> : vector<8x128xf32>
    %298 = tpu.matmul %257, %8, %cst_51 {dimension_numbers = #tpu.dot_dimension_numbers<[1], [0], [0], [1], [0, 0, 1, 1], [], []>} : vector<8x32xf32>, vector<32x128xf32>, vector<8x128xf32> -> vector<8x128xf32>
    %299 = vector.broadcast %9 : vector<1x128xf32> to vector<8x128xf32>
    %300 = arith.addf %298, %299 : vector<8x128xf32>
    %cst_52 = arith.constant dense<0.000000e+00> : vector<8x128xf32>
    %301 = tpu.matmul %278, %7, %cst_52 {dimension_numbers = #tpu.dot_dimension_numbers<[1], [0], [0], [1], [0, 0, 1, 1], [], []>} : vector<8x32xf32>, vector<32x128xf32>, vector<8x128xf32> -> vector<8x128xf32>
    %302 = arith.addf %300, %301 : vector<8x128xf32>
    %303 = arith.negf %302 : vector<8x128xf32>
    %304 = math.exp %303 : vector<8x128xf32>
    %cst_53 = arith.constant 1.000000e+00 : f32
    %305 = vector.broadcast %cst_53 : f32 to vector<8x128xf32>
    %306 = arith.addf %305, %304 : vector<8x128xf32>
    %307 = arith.divf %305, %306 : vector<8x128xf32>
    %308 = math.tanh %302 : vector<8x128xf32>
    %309 = arith.select %15, %308, %307 : vector<8x128xi1>, vector<8x128xf32>
    %310 = vector.extract_strided_slice %309 {offsets = [0, 0], sizes = [8, 32], strides = [1, 1]} : vector<8x128xf32> to vector<8x32xf32>
    %311 = vector.extract_strided_slice %309 {offsets = [0, 32], sizes = [8, 32], strides = [1, 1]} : vector<8x128xf32> to vector<8x32xf32>
    %312 = vector.extract_strided_slice %309 {offsets = [0, 64], sizes = [8, 32], strides = [1, 1]} : vector<8x128xf32> to vector<8x32xf32>
    %313 = vector.extract_strided_slice %309 {offsets = [0, 96], sizes = [8, 32], strides = [1, 1]} : vector<8x128xf32> to vector<8x32xf32>
    %314 = arith.mulf %311, %276 : vector<8x32xf32>
    %315 = arith.mulf %310, %312 : vector<8x32xf32>
    %316 = arith.addf %314, %315 : vector<8x32xf32>
    %317 = math.tanh %316 : vector<8x32xf32>
    %318 = arith.mulf %313, %317 : vector<8x32xf32>
    %cst_54 = arith.constant dense<0.000000e+00> : vector<8x128xf32>
    %319 = tpu.matmul %297, %8, %cst_54 {dimension_numbers = #tpu.dot_dimension_numbers<[1], [0], [0], [1], [0, 0, 1, 1], [], []>} : vector<8x32xf32>, vector<32x128xf32>, vector<8x128xf32> -> vector<8x128xf32>
    %320 = vector.broadcast %9 : vector<1x128xf32> to vector<8x128xf32>
    %321 = arith.addf %319, %320 : vector<8x128xf32>
    %cst_55 = arith.constant dense<0.000000e+00> : vector<8x128xf32>
    %322 = tpu.matmul %318, %7, %cst_55 {dimension_numbers = #tpu.dot_dimension_numbers<[1], [0], [0], [1], [0, 0, 1, 1], [], []>} : vector<8x32xf32>, vector<32x128xf32>, vector<8x128xf32> -> vector<8x128xf32>
    %323 = arith.addf %321, %322 : vector<8x128xf32>
    %324 = arith.negf %323 : vector<8x128xf32>
    %325 = math.exp %324 : vector<8x128xf32>
    %cst_56 = arith.constant 1.000000e+00 : f32
    %326 = vector.broadcast %cst_56 : f32 to vector<8x128xf32>
    %327 = arith.addf %326, %325 : vector<8x128xf32>
    %328 = arith.divf %326, %327 : vector<8x128xf32>
    %329 = math.tanh %323 : vector<8x128xf32>
    %330 = arith.select %15, %329, %328 : vector<8x128xi1>, vector<8x128xf32>
    %331 = vector.extract_strided_slice %330 {offsets = [0, 0], sizes = [8, 32], strides = [1, 1]} : vector<8x128xf32> to vector<8x32xf32>
    %332 = vector.extract_strided_slice %330 {offsets = [0, 32], sizes = [8, 32], strides = [1, 1]} : vector<8x128xf32> to vector<8x32xf32>
    %333 = vector.extract_strided_slice %330 {offsets = [0, 64], sizes = [8, 32], strides = [1, 1]} : vector<8x128xf32> to vector<8x32xf32>
    %334 = vector.extract_strided_slice %330 {offsets = [0, 96], sizes = [8, 32], strides = [1, 1]} : vector<8x128xf32> to vector<8x32xf32>
    %335 = arith.mulf %332, %316 : vector<8x32xf32>
    %336 = arith.mulf %331, %333 : vector<8x32xf32>
    %337 = arith.addf %335, %336 : vector<8x32xf32>
    %338 = math.tanh %337 : vector<8x32xf32>
    %339 = arith.mulf %334, %338 : vector<8x32xf32>
    %340 = tpu.concatenate %78, %118, %158, %198, %238, %278, %318, %339 in 0 : vector<8x32xf32>, vector<8x32xf32>, vector<8x32xf32>, vector<8x32xf32>, vector<8x32xf32>, vector<8x32xf32>, vector<8x32xf32>, vector<8x32xf32> -> vector<64x32xf32>
    %c0_57 = arith.constant 0 : index
    %c0_58 = arith.constant 0 : index
    %341 = vector.load %arg7[%c0_57, %c0_58] : memref<32x2xf32, #tpu.memory_space<vmem>>, vector<32x2xf32>
    %cst_59 = arith.constant dense<0.000000e+00> : vector<64x2xf32>
    %342 = tpu.matmul %340, %341, %cst_59 {dimension_numbers = #tpu.dot_dimension_numbers<[1], [0], [0], [1], [0, 0, 1, 1], [], []>} : vector<64x32xf32>, vector<32x2xf32>, vector<64x2xf32> -> vector<64x2xf32>
    %c0_60 = arith.constant 0 : index
    %c0_61 = arith.constant 0 : index
    %343 = vector.load %arg8[%c0_60, %c0_61] : memref<1x2xf32, #tpu.memory_space<vmem>>, vector<1x2xf32>
    %344 = vector.broadcast %343 : vector<1x2xf32> to vector<64x2xf32>
    %345 = arith.addf %342, %344 : vector<64x2xf32>
    %c0_62 = arith.constant 0 : index
    %c0_63 = arith.constant 0 : index
    %346 = vector.load %arg9[%c0_62, %c0_63] : memref<64x2xf32, #tpu.memory_space<vmem>>, vector<64x2xf32>
    tpu.vector_store %arg9[%c0_62, %c0_63], %345 {strides = array<i32>} : memref<64x2xf32, #tpu.memory_space<vmem>>, vector<64x2xf32>,
    return
  }
}

</mosaic_0001>

<llo_original>
// kernel: lstm_trainer_forward.1
$region0: #{lstm_trainer_forward.1}
  #allocation0 [shape = 'u32[]', space=smem, size = 0x4, offset = 0x4, fixed_abs, tag = 'smem constant byte address 0x4 - core index']
  #allocation1 [shape = 'u32[72,128]{1,0:T(1,128)}', space=vmem, size = 0x9000, scoped, tag = 'internal scratch']
  %s0 = inlined_call_operand.vmem [shape: f32[64,4], index: 0, kind: input, shape index: {}]
  %s1 = inlined_call_operand.vmem [shape: f32[4,128], index: 1, kind: input, shape index: {}]
  %s2 = inlined_call_operand.vmem [shape: f32[32,128], index: 2, kind: input, shape index: {}]
  %s3 = inlined_call_operand.vmem [shape: f32[1,128], index: 3, kind: input, shape index: {}]
  %s4 = inlined_call_operand.vmem [shape: f32[32,128], index: 4, kind: input, shape index: {}]
  %s5 = inlined_call_operand.vmem [shape: f32[32,128], index: 5, kind: input, shape index: {}]
  %s6 = inlined_call_operand.vmem [shape: f32[1,128], index: 6, kind: input, shape index: {}]
  %s7 = inlined_call_operand.vmem [shape: f32[32,2], index: 7, kind: input, shape index: {}]
  %s8 = inlined_call_operand.vmem [shape: f32[1,2], index: 8, kind: input, shape index: {}]
  %s9 = inlined_call_operand.vmem [shape: f32[64,2], index: 9, kind: output, shape index: {}]
  %s10 = sld [smem:[#allocation0]]
  $region46: #{lstm_trainer_forward.1} parent=0
    _
  %s12 = ssub.s32 1, %s10
  %s13 = scalar_select 0, %s12, %s10
  // Predicated region
  $region2: #{lstm_trainer_forward.1} parent=0 // pred_check
    _
  $region3: #{lstm_trainer_forward.1} parent=0 // pred_check_branch
    %15 = sbr.rel (0) target = $region5
  $region4: #{lstm_trainer_forward.1} parent=0 // pred_region
    _
  $region5: #{lstm_trainer_forward.1} parent=0 // pred_fallthru
    _
  // Predicated region
  $region6: #{lstm_trainer_forward.1} parent=0 // pred_check
    _
  $region7: #{lstm_trainer_forward.1} parent=0 // pred_check_branch
    %17 = sbr.rel (0) target = $region9
  $region8: #{lstm_trainer_forward.1} parent=0 // pred_region
    _
  $region9: #{lstm_trainer_forward.1} parent=0 // pred_fallthru
    _
  // Predicated region
  $region10: #{lstm_trainer_forward.1} parent=0 // pred_check
    _
  $region11: #{lstm_trainer_forward.1} parent=0 // pred_check_branch
    %19 = sbr.rel (0) target = $region13
  $region12: #{lstm_trainer_forward.1} parent=0 // pred_region
    _
  $region13: #{lstm_trainer_forward.1} parent=0 // pred_fallthru
    _
  // Predicated region
  $region14: #{lstm_trainer_forward.1} parent=0 // pred_check
    _
  $region15: #{lstm_trainer_forward.1} parent=0 // pred_check_branch
    %21 = sbr.rel (0) target = $region17
  $region16: #{lstm_trainer_forward.1} parent=0 // pred_region
    _
  $region17: #{lstm_trainer_forward.1} parent=0 // pred_fallthru
    _
  // Predicated region
  $region18: #{lstm_trainer_forward.1} parent=0 // pred_check
    _
  $region19: #{lstm_trainer_forward.1} parent=0 // pred_check_branch
    %23 = sbr.rel (0) target = $region21
  $region20: #{lstm_trainer_forward.1} parent=0 // pred_region
    _
  $region21: #{lstm_trainer_forward.1} parent=0 // pred_fallthru
    _
  // Predicated region
  $region22: #{lstm_trainer_forward.1} parent=0 // pred_check
    _
  $region23: #{lstm_trainer_forward.1} parent=0 // pred_check_branch
    %25 = sbr.rel (0) target = $region25
  $region24: #{lstm_trainer_forward.1} parent=0 // pred_region
    _
  $region25: #{lstm_trainer_forward.1} parent=0 // pred_fallthru
    _
  // Predicated region
  $region26: #{lstm_trainer_forward.1} parent=0 // pred_check
    _
  $region27: #{lstm_trainer_forward.1} parent=0 // pred_check_branch
    %27 = sbr.rel (0) target = $region29
  $region28: #{lstm_trainer_forward.1} parent=0 // pred_region
    _
  $region29: #{lstm_trainer_forward.1} parent=0 // pred_fallthru
    _
  // Predicated region
  $region30: #{lstm_trainer_forward.1} parent=0 // pred_check
    _
  $region31: #{lstm_trainer_forward.1} parent=0 // pred_check_branch
    %29 = sbr.rel (0) target = $region33
  $region32: #{lstm_trainer_forward.1} parent=0 // pred_region
    _
  $region33: #{lstm_trainer_forward.1} parent=0 // pred_fallthru
    _
  // Predicated region
  $region34: #{lstm_trainer_forward.1} parent=0 // pred_check
    _
  $region35: #{lstm_trainer_forward.1} parent=0 // pred_check_branch
    %31 = sbr.rel (0) target = $region37
  $region36: #{lstm_trainer_forward.1} parent=0 // pred_region
    _
  $region37: #{lstm_trainer_forward.1} parent=0 // pred_fallthru
    _
  %v32 = vld [vmem:[%s0] sm:$0xff]
  %v33 = vld [vmem:[%s0 + $0x8] sm:$0xff]
  %v34 = vld [vmem:[%s0 + $0x10] sm:$0xff]
  %v35 = vld [vmem:[%s0 + $0x18] sm:$0xff]
  %v36 = vld [vmem:[%s0 + $0x20] sm:$0xff]
  %v37 = vld [vmem:[%s0 + $0x28] sm:$0xff]
  %v38 = vld [vmem:[%s0 + $0x30] sm:$0xff]
  %v39 = vld [vmem:[%s0 + $0x38] sm:$0xff]
  %v40 = vld [vmem:[%s1] sm:$0xf]
  %v41 = vld [vmem:[%s3] sm:$0x1]
  %v43 = vperm.slane %v41, 0
  %vm45 = vcmask 31744
  %v47 = vsel %vm45, %v32, 0
  %v50 = vsel %vm45, %v33, 0
  %v53 = vsel %vm45, %v34, 0
  %v56 = vsel %vm45, %v35, 0
  %v59 = vsel %vm45, %v36, 0
  %v62 = vsel %vm45, %v37, 0
  %v65 = vsel %vm45, %v38, 0
  %v68 = vsel %vm45, %v39, 0
  %vm70 = vcmask 1043456
  %v72 = vsel %vm70, %v40, 0
  %74 = vmatpush.msra.mxu0 0.0
  %75 = vmatpush.msra.mxu0 0.0
  %76 = vmatpush.msra.mxu0 0.0
  %77 = vmatpush.msra.mxu0 0.0
  %78 = vmatpush.msra.mxu0 0.0
  %79 = vmatpush.msra.mxu0 0.0
  %80 = vmatpush.msra.mxu0 0.0
  %81 = vmatpush.msra.mxu0 0.0
  %82 = vmatpush.msra.mxu0 0.0
  %83 = vmatpush.msra.mxu0 0.0
  %84 = vmatpush.msra.mxu0 0.0
  %85 = vmatpush.msra.mxu0 0.0
  %86 = vmatpush.msra.mxu0 0.0
  %87 = vmatpush.msra.mxu0 0.0
  %88 = vmatpush.msra.mxu0 0.0
  %89 = vmatpush.msra.mxu0 %v72
  %90 = vmatmul.f32.gmra.mxu0 %v47
  %v91 = vpop.f32.mrf.mxu0
  %v92 = vadd.f32 %v43, %v91
  %93 = vmatmul.f32.gmra.mxu0 %v50
  %v94 = vpop.f32.mrf.mxu0
  %v95 = vadd.f32 %v43, %v94
  %96 = vmatmul.f32.gmra.mxu0 %v53
  %v97 = vpop.f32.mrf.mxu0
  %v98 = vadd.f32 %v43, %v97
  %99 = vmatmul.f32.gmra.mxu0 %v56
  %v100 = vpop.f32.mrf.mxu0
  %v101 = vadd.f32 %v43, %v100
  %102 = vmatmul.f32.gmra.mxu0 %v59
  %v103 = vpop.f32.mrf.mxu0
  %v104 = vadd.f32 %v43, %v103
  %105 = vmatmul.f32.gmra.mxu0 %v62
  %v106 = vpop.f32.mrf.mxu0
  %v107 = vadd.f32 %v43, %v106
  %108 = vmatmul.f32.gmra.mxu0 %v65
  %v109 = vpop.f32.mrf.mxu0
  %v110 = vadd.f32 %v43, %v109
  %111 = vmatmul.f32.gmra.mxu0 %v68
  %v112 = vpop.f32.mrf.mxu0
  %v113 = vadd.f32 %v43, %v112
  %114 = vdwg.mxu0
  %v115 = vld [vmem:[%s2] sm:$0xff]
  %v116 = vld [vmem:[%s2 + $0x8] sm:$0xff]
  %v117 = vld [vmem:[%s2 + $0x10] sm:$0xff]
  %v118 = vld [vmem:[%s2 + $0x18] sm:$0xff]
  %v119 = vld [vmem:[%s5] sm:$0xff]
  %v120 = vld [vmem:[%s5 + $0x8] sm:$0xff]
  %v121 = vld [vmem:[%s5 + $0x10] sm:$0xff]
  %v122 = vld [vmem:[%s5 + $0x18] sm:$0xff]
  %v123 = vld [vmem:[%s4] sm:$0xff]
  %v124 = vld [vmem:[%s4 + $0x8] sm:$0xff]
  %v125 = vld [vmem:[%s4 + $0x10] sm:$0xff]
  %v126 = vld [vmem:[%s4 + $0x18] sm:$0xff]
  %v127 = vld [vmem:[%s6] sm:$0x1]
  %v128 = vlaneseq
  %v129 = vand.u32 %v128, 127
  %vm130 = vcmp.ge.s32.totalorder %v129, 64
  %vm131 = vcmp.lt.s32.totalorder %v129, 96
  %vm132 = vmand %vm130, %vm131
  %vm133 = vcmask 261120
  %v135 = vsel %vm133, 0.0, 0
  %137 = vmatpush.msra.mxu0 0.0
  %138 = vmatpush.msra.mxu0 0.0
  %139 = vmatpush.msra.mxu0 0.0
  %140 = vmatpush.msra.mxu0 0.0
  %141 = vmatpush.msra.mxu0 0.0
  %142 = vmatpush.msra.mxu0 0.0
  %143 = vmatpush.msra.mxu0 0.0
  %144 = vmatpush.msra.mxu0 0.0
  %145 = vmatpush.msra.mxu0 0.0
  %146 = vmatpush.msra.mxu0 0.0
  %147 = vmatpush.msra.mxu0 0.0
  %148 = vmatpush.msra.mxu0 0.0
  %149 = vmatpush.msra.mxu0 %v118
  %150 = vmatpush.msra.mxu0 %v117
  %151 = vmatpush.msra.mxu0 %v116
  %152 = vmatpush.msra.mxu0 %v115
  %153 = vmatmul.f32.gmra.mxu0 %v135
  %v154 = vpop.f32.mrf.mxu0
  %v155 = vadd.f32 0.0, %v154
  %156 = vdwg.mxu0
  %v157 = vadd.f32 %v92, %v155
  %v158 = vxor.u32 %v157, 2147483648
  %v159 = vmul.f32 %v158, 1.442695
  %v160 = vpow.pop %v159
  %v161 = vadd.f32 %v160, 1.0
  %v162 = vrcp.pop %v161
  %v163 = vmul.f32 %v161, %v162
  %v164 = vsub.f32 1.0, %v163
  %v165 = vmul.f32 %v162, %v164
  %v166 = vadd.f32 %v162, %v165
  %vm167 = vweird.f32 %v161
  %vm168 = vweird.f32 %v162
  %vm169 = vmor %vm167, %vm168
  %v170 = vsel %vm169, %v162, %v166
  %v171 = vand.u32 2147483647, %v161
  %vm172 = vcmp.eq.f32.partialorder %v171, 8.507059e+37
  %v173 = vand.u32 %v161, 2147483648
  %v174 = vor.u32 1.1754944e-38, %v173
  %v175 = vsel %vm172, %v174, %v170
  %v176 = vmul.f32 1.0, %v175
  %v177 = vtanh.pop %v157
  %v178 = vsel %vm132, %v177, %v176
  %v179 = vmul.f32 %v178, 0.0
  %181 = vrot.lane.b32.xlu0 %v178, 64
  %v182 = vpop.permute.xlu0 %181
  %v184 = vmul.f32 %v178, %v182
  %186 = vrot.lane.b32.xlu0 %v184, 32
  %v187 = vpop.permute.xlu0 %186
  %v189 = vadd.f32 %v179, %v187
  %v190 = vtanh.pop %v189
  %192 = vrot.lane.b32.xlu0 %v190, 64
  %v193 = vpop.permute.xlu0 %192
  %v195 = vmul.f32 %v178, %v193
  %197 = vrot.lane.b32.xlu0 %v195, 32
  %v198 = vpop.permute.xlu0 %197
  %v199 = vsel %vm133, %v198, 0
  %201 = vmatpush.msra.mxu0 0.0
  %202 = vmatpush.msra.mxu0 0.0
  %203 = vmatpush.msra.mxu0 0.0
  %204 = vmatpush.msra.mxu0 0.0
  %205 = vmatpush.msra.mxu0 0.0
  %206 = vmatpush.msra.mxu0 0.0
  %207 = vmatpush.msra.mxu0 0.0
  %208 = vmatpush.msra.mxu0 0.0
  %209 = vmatpush.msra.mxu0 0.0
  %210 = vmatpush.msra.mxu0 0.0
  %211 = vmatpush.msra.mxu0 0.0
  %212 = vmatpush.msra.mxu0 0.0
  %213 = vmatpush.msra.mxu0 %v118
  %214 = vmatpush.msra.mxu0 %v117
  %215 = vmatpush.msra.mxu0 %v116
  %216 = vmatpush.msra.mxu0 %v115
  %217 = vmatmul.f32.gmra.mxu0 %v199
  %v218 = vpop.f32.mrf.mxu0
  %v219 = vadd.f32 0.0, %v218
  %220 = vdwg.mxu0
  %v221 = vadd.f32 %v95, %v219
  %v222 = vxor.u32 %v221, 2147483648
  %v223 = vmul.f32 %v222, 1.442695
  %v224 = vpow.pop %v223
  %v225 = vadd.f32 %v224, 1.0
  %v226 = vrcp.pop %v225
  %v227 = vmul.f32 %v225, %v226
  %v228 = vsub.f32 1.0, %v227
  %v229 = vmul.f32 %v226, %v228
  %v230 = vadd.f32 %v226, %v229
  %vm231 = vweird.f32 %v225
  %vm232 = vweird.f32 %v226
  %vm233 = vmor %vm231, %vm232
  %v234 = vsel %vm233, %v226, %v230
  %v235 = vand.u32 2147483647, %v225
  %vm236 = vcmp.eq.f32.partialorder %v235, 8.507059e+37
  %v237 = vand.u32 %v225, 2147483648
  %v238 = vor.u32 1.1754944e-38, %v237
  %v239 = vsel %vm236, %v238, %v234
  %v240 = vmul.f32 1.0, %v239
  %v241 = vtanh.pop %v221
  %v242 = vsel %vm132, %v241, %v240
  %v243 = vmul.f32 %v242, %v189
  %245 = vrot.lane.b32.xlu0 %v242, 64
  %v246 = vpop.permute.xlu0 %245
  %v248 = vmul.f32 %v242, %v246
  %250 = vrot.lane.b32.xlu0 %v248, 32
  %v251 = vpop.permute.xlu0 %250
  %v253 = vadd.f32 %v243, %v251
  %v254 = vtanh.pop %v253
  %256 = vrot.lane.b32.xlu0 %v254, 64
  %v257 = vpop.permute.xlu0 %256
  %v259 = vmul.f32 %v242, %v257
  %v261 = vperm.slane %v127, 0
  %263 = vmatpush.msra.mxu0 0.0
  %264 = vmatpush.msra.mxu0 0.0
  %265 = vmatpush.msra.mxu0 0.0
  %266 = vmatpush.msra.mxu0 0.0
  %267 = vmatpush.msra.mxu0 0.0
  %268 = vmatpush.msra.mxu0 0.0
  %269 = vmatpush.msra.mxu0 0.0
  %270 = vmatpush.msra.mxu0 0.0
  %271 = vmatpush.msra.mxu0 0.0
  %272 = vmatpush.msra.mxu0 0.0
  %273 = vmatpush.msra.mxu0 0.0
  %274 = vmatpush.msra.mxu0 0.0
  %275 = vmatpush.msra.mxu0 %v126
  %276 = vmatpush.msra.mxu0 %v125
  %277 = vmatpush.msra.mxu0 %v124
  %278 = vmatpush.msra.mxu0 %v123
  %279 = vmatmul.f32.gmra.mxu0 %v199
  %v280 = vpop.f32.mrf.mxu0
  %v281 = vadd.f32 %v261, %v280
  %282 = vdwg.mxu0
  %283 = vmatpush.msra.mxu0 0.0
  %284 = vmatpush.msra.mxu0 0.0
  %285 = vmatpush.msra.mxu0 0.0
  %286 = vmatpush.msra.mxu0 0.0
  %287 = vmatpush.msra.mxu0 0.0
  %288 = vmatpush.msra.mxu0 0.0
  %289 = vmatpush.msra.mxu0 0.0
  %290 = vmatpush.msra.mxu0 0.0
  %291 = vmatpush.msra.mxu0 0.0
  %292 = vmatpush.msra.mxu0 0.0
  %293 = vmatpush.msra.mxu0 0.0
  %294 = vmatpush.msra.mxu0 0.0
  %295 = vmatpush.msra.mxu0 %v122
  %296 = vmatpush.msra.mxu0 %v121
  %297 = vmatpush.msra.mxu0 %v120
  %298 = vmatpush.msra.mxu0 %v119
  %299 = vmatmul.f32.gmra.mxu0 %v135
  %v300 = vpop.f32.mrf.mxu0
  %v301 = vadd.f32 0.0, %v300
  %302 = vdwg.mxu0
  %v303 = vadd.f32 %v281, %v301
  %v304 = vxor.u32 %v303, 2147483648
  %v305 = vmul.f32 %v304, 1.442695
  %v306 = vpow.pop %v305
  %v307 = vadd.f32 %v306, 1.0
  %v308 = vrcp.pop %v307
  %v309 = vmul.f32 %v307, %v308
  %v310 = vsub.f32 1.0, %v309
  %v311 = vmul.f32 %v308, %v310
  %v312 = vadd.f32 %v308, %v311
  %vm313 = vweird.f32 %v307
  %vm314 = vweird.f32 %v308
  %vm315 = vmor %vm313, %vm314
  %v316 = vsel %vm315, %v308, %v312
  %v317 = vand.u32 2147483647, %v307
  %vm318 = vcmp.eq.f32.partialorder %v317, 8.507059e+37
  %v319 = vand.u32 %v307, 2147483648
  %v320 = vor.u32 1.1754944e-38, %v319
  %v321 = vsel %vm318, %v320, %v316
  %v322 = vmul.f32 1.0, %v321
  %v323 = vtanh.pop %v303
  %v324 = vsel %vm132, %v323, %v322
  %v325 = vmul.f32 %v324, 0.0
  %327 = vrot.lane.b32.xlu0 %v324, 64
  %v328 = vpop.permute.xlu0 %327
  %v330 = vmul.f32 %v324, %v328
  %332 = vrot.lane.b32.xlu0 %v330, 32
  %v333 = vpop.permute.xlu0 %332
  %v335 = vadd.f32 %v325, %v333
  %v336 = vtanh.pop %v335
  %338 = vrot.lane.b32.xlu0 %v336, 64
  %v339 = vpop.permute.xlu0 %338
  %v341 = vmul.f32 %v324, %v339
  %343 = vrot.lane.b32.xlu0 %v259, 32
  %v344 = vpop.permute.xlu0 %343
  %v345 = vsel %vm133, %v344, 0
  %347 = vmatpush.msra.mxu0 0.0
  %348 = vmatpush.msra.mxu0 0.0
  %349 = vmatpush.msra.mxu0 0.0
  %350 = vmatpush.msra.mxu0 0.0
  %351 = vmatpush.msra.mxu0 0.0
  %352 = vmatpush.msra.mxu0 0.0
  %353 = vmatpush.msra.mxu0 0.0
  %354 = vmatpush.msra.mxu0 0.0
  %355 = vmatpush.msra.mxu0 0.0
  %356 = vmatpush.msra.mxu0 0.0
  %357 = vmatpush.msra.mxu0 0.0
  %358 = vmatpush.msra.mxu0 0.0
  %359 = vmatpush.msra.mxu0 %v118
  %360 = vmatpush.msra.mxu0 %v117
  %361 = vmatpush.msra.mxu0 %v116
  %362 = vmatpush.msra.mxu0 %v115
  %363 = vmatmul.f32.gmra.mxu0 %v345
  %v364 = vpop.f32.mrf.mxu0
  %v365 = vadd.f32 0.0, %v364
  %366 = vdwg.mxu0
  %v367 = vadd.f32 %v98, %v365
  %v368 = vxor.u32 %v367, 2147483648
  %v369 = vmul.f32 %v368, 1.442695
  %v370 = vpow.pop %v369
  %v371 = vadd.f32 %v370, 1.0
  %v372 = vrcp.pop %v371
  %v373 = vmul.f32 %v371, %v372
  %v374 = vsub.f32 1.0, %v373
  %v375 = vmul.f32 %v372, %v374
  %v376 = vadd.f32 %v372, %v375
  %vm377 = vweird.f32 %v371
  %vm378 = vweird.f32 %v372
  %vm379 = vmor %vm377, %vm378
  %v380 = vsel %vm379, %v372, %v376
  %v381 = vand.u32 2147483647, %v371
  %vm382 = vcmp.eq.f32.partialorder %v381, 8.507059e+37
  %v383 = vand.u32 %v371, 2147483648
  %v384 = vor.u32 1.1754944e-38, %v383
  %v385 = vsel %vm382, %v384, %v380
  %v386 = vmul.f32 1.0, %v385
  %v387 = vtanh.pop %v367
  %v388 = vsel %vm132, %v387, %v386
  %v389 = vmul.f32 %v388, %v253
  %391 = vrot.lane.b32.xlu0 %v388, 64
  %v392 = vpop.permute.xlu0 %391
  %v394 = vmul.f32 %v388, %v392
  %396 = vrot.lane.b32.xlu0 %v394, 32
  %v397 = vpop.permute.xlu0 %396
  %v399 = vadd.f32 %v389, %v397
  %v400 = vtanh.pop %v399
  %402 = vrot.lane.b32.xlu0 %v400, 64
  %v403 = vpop.permute.xlu0 %402
  %v405 = vmul.f32 %v388, %v403
  %406 = vmatpush.msra.mxu0 0.0
  %407 = vmatpush.msra.mxu0 0.0
  %408 = vmatpush.msra.mxu0 0.0
  %409 = vmatpush.msra.mxu0 0.0
  %410 = vmatpush.msra.mxu0 0.0
  %411 = vmatpush.msra.mxu0 0.0
  %412 = vmatpush.msra.mxu0 0.0
  %413 = vmatpush.msra.mxu0 0.0
  %414 = vmatpush.msra.mxu0 0.0
  %415 = vmatpush.msra.mxu0 0.0
  %416 = vmatpush.msra.mxu0 0.0
  %417 = vmatpush.msra.mxu0 0.0
  %418 = vmatpush.msra.mxu0 %v126
  %419 = vmatpush.msra.mxu0 %v125
  %420 = vmatpush.msra.mxu0 %v124
  %421 = vmatpush.msra.mxu0 %v123
  %422 = vmatmul.f32.gmra.mxu0 %v345
  %v423 = vpop.f32.mrf.mxu0
  %v424 = vadd.f32 %v261, %v423
  %425 = vdwg.mxu0
  %427 = vrot.lane.b32.xlu0 %v341, 32
  %v428 = vpop.permute.xlu0 %427
  %v429 = vsel %vm133, %v428, 0
  %431 = vmatpush.msra.mxu0 0.0
  %432 = vmatpush.msra.mxu0 0.0
  %433 = vmatpush.msra.mxu0 0.0
  %434 = vmatpush.msra.mxu0 0.0
  %435 = vmatpush.msra.mxu0 0.0
  %436 = vmatpush.msra.mxu0 0.0
  %437 = vmatpush.msra.mxu0 0.0
  %438 = vmatpush.msra.mxu0 0.0
  %439 = vmatpush.msra.mxu0 0.0
  %440 = vmatpush.msra.mxu0 0.0
  %441 = vmatpush.msra.mxu0 0.0
  %442 = vmatpush.msra.mxu0 0.0
  %443 = vmatpush.msra.mxu0 %v122
  %444 = vmatpush.msra.mxu0 %v121
  %445 = vmatpush.msra.mxu0 %v120
  %446 = vmatpush.msra.mxu0 %v119
  %447 = vmatmul.f32.gmra.mxu0 %v429
  %v448 = vpop.f32.mrf.mxu0
  %v449 = vadd.f32 0.0, %v448
  %450 = vdwg.mxu0
  %v451 = vadd.f32 %v424, %v449
  %v452 = vxor.u32 %v451, 2147483648
  %v453 = vmul.f32 %v452, 1.442695
  %v454 = vpow.pop %v453
  %v455 = vadd.f32 %v454, 1.0
  %v456 = vrcp.pop %v455
  %v457 = vmul.f32 %v455, %v456
  %v458 = vsub.f32 1.0, %v457
  %v459 = vmul.f32 %v456, %v458
  %v460 = vadd.f32 %v456, %v459
  %vm461 = vweird.f32 %v455
  %vm462 = vweird.f32 %v456
  %vm463 = vmor %vm461, %vm462
  %v464 = vsel %vm463, %v456, %v460
  %v465 = vand.u32 2147483647, %v455
  %vm466 = vcmp.eq.f32.partialorder %v465, 8.507059e+37
  %v467 = vand.u32 %v455, 2147483648
  %v468 = vor.u32 1.1754944e-38, %v467
  %v469 = vsel %vm466, %v468, %v464
  %v470 = vmul.f32 1.0, %v469
  %v471 = vtanh.pop %v451
  %v472 = vsel %vm132, %v471, %v470
  %v473 = vmul.f32 %v472, %v335
  %475 = vrot.lane.b32.xlu0 %v472, 64
  %v476 = vpop.permute.xlu0 %475
  %v478 = vmul.f32 %v472, %v476
  %480 = vrot.lane.b32.xlu0 %v478, 32
  %v481 = vpop.permute.xlu0 %480
  %v483 = vadd.f32 %v473, %v481
  %v484 = vtanh.pop %v483
  %486 = vrot.lane.b32.xlu0 %v484, 64
  %v487 = vpop.permute.xlu0 %486
  %v489 = vmul.f32 %v472, %v487
  %491 = vrot.lane.b32.xlu0 %v405, 32
  %v492 = vpop.permute.xlu0 %491
  %v493 = vsel %vm133, %v492, 0
  %495 = vmatpush.msra.mxu0 0.0
  %496 = vmatpush.msra.mxu0 0.0
  %497 = vmatpush.msra.mxu0 0.0
  %498 = vmatpush.msra.mxu0 0.0
  %499 = vmatpush.msra.mxu0 0.0
  %500 = vmatpush.msra.mxu0 0.0
  %501 = vmatpush.msra.mxu0 0.0
  %502 = vmatpush.msra.mxu0 0.0
  %503 = vmatpush.msra.mxu0 0.0
  %504 = vmatpush.msra.mxu0 0.0
  %505 = vmatpush.msra.mxu0 0.0
  %506 = vmatpush.msra.mxu0 0.0
  %507 = vmatpush.msra.mxu0 %v118
  %508 = vmatpush.msra.mxu0 %v117
  %509 = vmatpush.msra.mxu0 %v116
  %510 = vmatpush.msra.mxu0 %v115
  %511 = vmatmul.f32.gmra.mxu0 %v493
  %v512 = vpop.f32.mrf.mxu0
  %v513 = vadd.f32 0.0, %v512
  %514 = vdwg.mxu0
  %v515 = vadd.f32 %v101, %v513
  %v516 = vxor.u32 %v515, 2147483648
  %v517 = vmul.f32 %v516, 1.442695
  %v518 = vpow.pop %v517
  %v519 = vadd.f32 %v518, 1.0
  %v520 = vrcp.pop %v519
  %v521 = vmul.f32 %v519, %v520
  %v522 = vsub.f32 1.0, %v521
  %v523 = vmul.f32 %v520, %v522
  %v524 = vadd.f32 %v520, %v523
  %vm525 = vweird.f32 %v519
  %vm526 = vweird.f32 %v520
  %vm527 = vmor %vm525, %vm526
  %v528 = vsel %vm527, %v520, %v524
  %v529 = vand.u32 2147483647, %v519
  %vm530 = vcmp.eq.f32.partialorder %v529, 8.507059e+37
  %v531 = vand.u32 %v519, 2147483648
  %v532 = vor.u32 1.1754944e-38, %v531
  %v533 = vsel %vm530, %v532, %v528
  %v534 = vmul.f32 1.0, %v533
  %v535 = vtanh.pop %v515
  %v536 = vsel %vm132, %v535, %v534
  %v537 = vmul.f32 %v536, %v399
  %539 = vrot.lane.b32.xlu0 %v536, 64
  %v540 = vpop.permute.xlu0 %539
  %v542 = vmul.f32 %v536, %v540
  %544 = vrot.lane.b32.xlu0 %v542, 32
  %v545 = vpop.permute.xlu0 %544
  %v547 = vadd.f32 %v537, %v545
  %v548 = vtanh.pop %v547
  %550 = vrot.lane.b32.xlu0 %v548, 64
  %v551 = vpop.permute.xlu0 %550
  %v553 = vmul.f32 %v536, %v551
  %554 = vmatpush.msra.mxu0 0.0
  %555 = vmatpush.msra.mxu0 0.0
  %556 = vmatpush.msra.mxu0 0.0
  %557 = vmatpush.msra.mxu0 0.0
  %558 = vmatpush.msra.mxu0 0.0
  %559 = vmatpush.msra.mxu0 0.0
  %560 = vmatpush.msra.mxu0 0.0
  %561 = vmatpush.msra.mxu0 0.0
  %562 = vmatpush.msra.mxu0 0.0
  %563 = vmatpush.msra.mxu0 0.0
  %564 = vmatpush.msra.mxu0 0.0
  %565 = vmatpush.msra.mxu0 0.0
  %566 = vmatpush.msra.mxu0 %v126
  %567 = vmatpush.msra.mxu0 %v125
  %568 = vmatpush.msra.mxu0 %v124
  %569 = vmatpush.msra.mxu0 %v123
  %570 = vmatmul.f32.gmra.mxu0 %v493
  %v571 = vpop.f32.mrf.mxu0
  %v572 = vadd.f32 %v261, %v571
  %573 = vdwg.mxu0
  %575 = vrot.lane.b32.xlu0 %v489, 32
  %v576 = vpop.permute.xlu0 %575
  %v577 = vsel %vm133, %v576, 0
  %579 = vmatpush.msra.mxu0 0.0
  %580 = vmatpush.msra.mxu0 0.0
  %581 = vmatpush.msra.mxu0 0.0
  %582 = vmatpush.msra.mxu0 0.0
  %583 = vmatpush.msra.mxu0 0.0
  %584 = vmatpush.msra.mxu0 0.0
  %585 = vmatpush.msra.mxu0 0.0
  %586 = vmatpush.msra.mxu0 0.0
  %587 = vmatpush.msra.mxu0 0.0
  %588 = vmatpush.msra.mxu0 0.0
  %589 = vmatpush.msra.mxu0 0.0
  %590 = vmatpush.msra.mxu0 0.0
  %591 = vmatpush.msra.mxu0 %v122
  %592 = vmatpush.msra.mxu0 %v121
  %593 = vmatpush.msra.mxu0 %v120
  %594 = vmatpush.msra.mxu0 %v119
  %595 = vmatmul.f32.gmra.mxu0 %v577
  %v596 = vpop.f32.mrf.mxu0
  %v597 = vadd.f32 0.0, %v596
  %598 = vdwg.mxu0
  %v599 = vadd.f32 %v572, %v597
  %v600 = vxor.u32 %v599, 2147483648
  %v601 = vmul.f32 %v600, 1.442695
  %v602 = vpow.pop %v601
  %v603 = vadd.f32 %v602, 1.0
  %v604 = vrcp.pop %v603
  %v605 = vmul.f32 %v603, %v604
  %v606 = vsub.f32 1.0, %v605
  %v607 = vmul.f32 %v604, %v606
  %v608 = vadd.f32 %v604, %v607
  %vm609 = vweird.f32 %v603
  %vm610 = vweird.f32 %v604
  %vm611 = vmor %vm609, %vm610
  %v612 = vsel %vm611, %v604, %v608
  %v613 = vand.u32 2147483647, %v603
  %vm614 = vcmp.eq.f32.partialorder %v613, 8.507059e+37
  %v615 = vand.u32 %v603, 2147483648
  %v616 = vor.u32 1.1754944e-38, %v615
  %v617 = vsel %vm614, %v616, %v612
  %v618 = vmul.f32 1.0, %v617
  %v619 = vtanh.pop %v599
  %v620 = vsel %vm132, %v619, %v618
  %v621 = vmul.f32 %v620, %v483
  %623 = vrot.lane.b32.xlu0 %v620, 64
  %v624 = vpop.permute.xlu0 %623
  %v626 = vmul.f32 %v620, %v624
  %628 = vrot.lane.b32.xlu0 %v626, 32
  %v629 = vpop.permute.xlu0 %628
  %v631 = vadd.f32 %v621, %v629
  %v632 = vtanh.pop %v631
  %634 = vrot.lane.b32.xlu0 %v632, 64
  %v635 = vpop.permute.xlu0 %634
  %v637 = vmul.f32 %v620, %v635
  %639 = vrot.lane.b32.xlu0 %v553, 32
  %v640 = vpop.permute.xlu0 %639
  %v641 = vsel %vm133, %v640, 0
  %643 = vmatpush.msra.mxu0 0.0
  %644 = vmatpush.msra.mxu0 0.0
  %645 = vmatpush.msra.mxu0 0.0
  %646 = vmatpush.msra.mxu0 0.0
  %647 = vmatpush.msra.mxu0 0.0
  %648 = vmatpush.msra.mxu0 0.0
  %649 = vmatpush.msra.mxu0 0.0
  %650 = vmatpush.msra.mxu0 0.0
  %651 = vmatpush.msra.mxu0 0.0
  %652 = vmatpush.msra.mxu0 0.0
  %653 = vmatpush.msra.mxu0 0.0
  %654 = vmatpush.msra.mxu0 0.0
  %655 = vmatpush.msra.mxu0 %v118
  %656 = vmatpush.msra.mxu0 %v117
  %657 = vmatpush.msra.mxu0 %v116
  %658 = vmatpush.msra.mxu0 %v115
  %659 = vmatmul.f32.gmra.mxu0 %v641
  %v660 = vpop.f32.mrf.mxu0
  %v661 = vadd.f32 0.0, %v660
  %662 = vdwg.mxu0
  %v663 = vadd.f32 %v104, %v661
  %v664 = vxor.u32 %v663, 2147483648
  %v665 = vmul.f32 %v664, 1.442695
  %v666 = vpow.pop %v665
  %v667 = vadd.f32 %v666, 1.0
  %v668 = vrcp.pop %v667
  %v669 = vmul.f32 %v667, %v668
  %v670 = vsub.f32 1.0, %v669
  %v671 = vmul.f32 %v668, %v670
  %v672 = vadd.f32 %v668, %v671
  %vm673 = vweird.f32 %v667
  %vm674 = vweird.f32 %v668
  %vm675 = vmor %vm673, %vm674
  %v676 = vsel %vm675, %v668, %v672
  %v677 = vand.u32 2147483647, %v667
  %vm678 = vcmp.eq.f32.partialorder %v677, 8.507059e+37
  %v679 = vand.u32 %v667, 2147483648
  %v680 = vor.u32 1.1754944e-38, %v679
  %v681 = vsel %vm678, %v680, %v676
  %v682 = vmul.f32 1.0, %v681
  %v683 = vtanh.pop %v663
  %v684 = vsel %vm132, %v683, %v682
  %v685 = vmul.f32 %v684, %v547
  %687 = vrot.lane.b32.xlu0 %v684, 64
  %v688 = vpop.permute.xlu0 %687
  %v690 = vmul.f32 %v684, %v688
  %692 = vrot.lane.b32.xlu0 %v690, 32
  %v693 = vpop.permute.xlu0 %692
  %v695 = vadd.f32 %v685, %v693
  %v696 = vtanh.pop %v695
  %698 = vrot.lane.b32.xlu0 %v696, 64
  %v699 = vpop.permute.xlu0 %698
  %v701 = vmul.f32 %v684, %v699
  %702 = vmatpush.msra.mxu0 0.0
  %703 = vmatpush.msra.mxu0 0.0
  %704 = vmatpush.msra.mxu0 0.0
  %705 = vmatpush.msra.mxu0 0.0
  %706 = vmatpush.msra.mxu0 0.0
  %707 = vmatpush.msra.mxu0 0.0
  %708 = vmatpush.msra.mxu0 0.0
  %709 = vmatpush.msra.mxu0 0.0
  %710 = vmatpush.msra.mxu0 0.0
  %711 = vmatpush.msra.mxu0 0.0
  %712 = vmatpush.msra.mxu0 0.0
  %713 = vmatpush.msra.mxu0 0.0
  %714 = vmatpush.msra.mxu0 %v126
  %715 = vmatpush.msra.mxu0 %v125
  %716 = vmatpush.msra.mxu0 %v124
  %717 = vmatpush.msra.mxu0 %v123
  %718 = vmatmul.f32.gmra.mxu0 %v641
  %v719 = vpop.f32.mrf.mxu0
  %v720 = vadd.f32 %v261, %v719
  %721 = vdwg.mxu0
  %723 = vrot.lane.b32.xlu0 %v637, 32
  %v724 = vpop.permute.xlu0 %723
  %v725 = vsel %vm133, %v724, 0
  %727 = vmatpush.msra.mxu0 0.0
  %728 = vmatpush.msra.mxu0 0.0
  %729 = vmatpush.msra.mxu0 0.0
  %730 = vmatpush.msra.mxu0 0.0
  %731 = vmatpush.msra.mxu0 0.0
  %732 = vmatpush.msra.mxu0 0.0
  %733 = vmatpush.msra.mxu0 0.0
  %734 = vmatpush.msra.mxu0 0.0
  %735 = vmatpush.msra.mxu0 0.0
  %736 = vmatpush.msra.mxu0 0.0
  %737 = vmatpush.msra.mxu0 0.0
  %738 = vmatpush.msra.mxu0 0.0
  %739 = vmatpush.msra.mxu0 %v122
  %740 = vmatpush.msra.mxu0 %v121
  %741 = vmatpush.msra.mxu0 %v120
  %742 = vmatpush.msra.mxu0 %v119
  %743 = vmatmul.f32.gmra.mxu0 %v725
  %v744 = vpop.f32.mrf.mxu0
  %v745 = vadd.f32 0.0, %v744
  %746 = vdwg.mxu0
  %v747 = vadd.f32 %v720, %v745
  %v748 = vxor.u32 %v747, 2147483648
  %v749 = vmul.f32 %v748, 1.442695
  %v750 = vpow.pop %v749
  %v751 = vadd.f32 %v750, 1.0
  %v752 = vrcp.pop %v751
  %v753 = vmul.f32 %v751, %v752
  %v754 = vsub.f32 1.0, %v753
  %v755 = vmul.f32 %v752, %v754
  %v756 = vadd.f32 %v752, %v755
  %vm757 = vweird.f32 %v751
  %vm758 = vweird.f32 %v752
  %vm759 = vmor %vm757, %vm758
  %v760 = vsel %vm759, %v752, %v756
  %v761 = vand.u32 2147483647, %v751
  %vm762 = vcmp.eq.f32.partialorder %v761, 8.507059e+37
  %v763 = vand.u32 %v751, 2147483648
  %v764 = vor.u32 1.1754944e-38, %v763
  %v765 = vsel %vm762, %v764, %v760
  %v766 = vmul.f32 1.0, %v765
  %v767 = vtanh.pop %v747
  %v768 = vsel %vm132, %v767, %v766
  %v769 = vmul.f32 %v768, %v631
  %771 = vrot.lane.b32.xlu0 %v768, 64
  %v772 = vpop.permute.xlu0 %771
  %v774 = vmul.f32 %v768, %v772
  %776 = vrot.lane.b32.xlu0 %v774, 32
  %v777 = vpop.permute.xlu0 %776
  %v779 = vadd.f32 %v769, %v777
  %v780 = vtanh.pop %v779
  %782 = vrot.lane.b32.xlu0 %v780, 64
  %v783 = vpop.permute.xlu0 %782
  %v785 = vmul.f32 %v768, %v783
  %787 = vrot.lane.b32.xlu0 %v701, 32
  %v788 = vpop.permute.xlu0 %787
  %v789 = vsel %vm133, %v788, 0
  %791 = vmatpush.msra.mxu0 0.0
  %792 = vmatpush.msra.mxu0 0.0
  %793 = vmatpush.msra.mxu0 0.0
  %794 = vmatpush.msra.mxu0 0.0
  %795 = vmatpush.msra.mxu0 0.0
  %796 = vmatpush.msra.mxu0 0.0
  %797 = vmatpush.msra.mxu0 0.0
  %798 = vmatpush.msra.mxu0 0.0
  %799 = vmatpush.msra.mxu0 0.0
  %800 = vmatpush.msra.mxu0 0.0
  %801 = vmatpush.msra.mxu0 0.0
  %802 = vmatpush.msra.mxu0 0.0
  %803 = vmatpush.msra.mxu0 %v118
  %804 = vmatpush.msra.mxu0 %v117
  %805 = vmatpush.msra.mxu0 %v116
  %806 = vmatpush.msra.mxu0 %v115
  %807 = vmatmul.f32.gmra.mxu0 %v789
  %v808 = vpop.f32.mrf.mxu0
  %v809 = vadd.f32 0.0, %v808
  %810 = vdwg.mxu0
  %v811 = vadd.f32 %v107, %v809
  %v812 = vxor.u32 %v811, 2147483648
  %v813 = vmul.f32 %v812, 1.442695
  %v814 = vpow.pop %v813
  %v815 = vadd.f32 %v814, 1.0
  %v816 = vrcp.pop %v815
  %v817 = vmul.f32 %v815, %v816
  %v818 = vsub.f32 1.0, %v817
  %v819 = vmul.f32 %v816, %v818
  %v820 = vadd.f32 %v816, %v819
  %vm821 = vweird.f32 %v815
  %vm822 = vweird.f32 %v816
  %vm823 = vmor %vm821, %vm822
  %v824 = vsel %vm823, %v816, %v820
  %v825 = vand.u32 2147483647, %v815
  %vm826 = vcmp.eq.f32.partialorder %v825, 8.507059e+37
  %v827 = vand.u32 %v815, 2147483648
  %v828 = vor.u32 1.1754944e-38, %v827
  %v829 = vsel %vm826, %v828, %v824
  %v830 = vmul.f32 1.0, %v829
  %v831 = vtanh.pop %v811
  %v832 = vsel %vm132, %v831, %v830
  %v833 = vmul.f32 %v832, %v695
  %835 = vrot.lane.b32.xlu0 %v832, 64
  %v836 = vpop.permute.xlu0 %835
  %v838 = vmul.f32 %v832, %v836
  %840 = vrot.lane.b32.xlu0 %v838, 32
  %v841 = vpop.permute.xlu0 %840
  %v843 = vadd.f32 %v833, %v841
  %v844 = vtanh.pop %v843
  %846 = vrot.lane.b32.xlu0 %v844, 64
  %v847 = vpop.permute.xlu0 %846
  %v849 = vmul.f32 %v832, %v847
  %850 = vmatpush.msra.mxu0 0.0
  %851 = vmatpush.msra.mxu0 0.0
  %852 = vmatpush.msra.mxu0 0.0
  %853 = vmatpush.msra.mxu0 0.0
  %854 = vmatpush.msra.mxu0 0.0
  %855 = vmatpush.msra.mxu0 0.0
  %856 = vmatpush.msra.mxu0 0.0
  %857 = vmatpush.msra.mxu0 0.0
  %858 = vmatpush.msra.mxu0 0.0
  %859 = vmatpush.msra.mxu0 0.0
  %860 = vmatpush.msra.mxu0 0.0
  %861 = vmatpush.msra.mxu0 0.0
  %862 = vmatpush.msra.mxu0 %v126
  %863 = vmatpush.msra.mxu0 %v125
  %864 = vmatpush.msra.mxu0 %v124
  %865 = vmatpush.msra.mxu0 %v123
  %866 = vmatmul.f32.gmra.mxu0 %v789
  %v867 = vpop.f32.mrf.mxu0
  %v868 = vadd.f32 %v261, %v867
  %869 = vdwg.mxu0
  %871 = vrot.lane.b32.xlu0 %v785, 32
  %v872 = vpop.permute.xlu0 %871
  %v873 = vsel %vm133, %v872, 0
  %875 = vmatpush.msra.mxu0 0.0
  %876 = vmatpush.msra.mxu0 0.0
  %877 = vmatpush.msra.mxu0 0.0
  %878 = vmatpush.msra.mxu0 0.0
  %879 = vmatpush.msra.mxu0 0.0
  %880 = vmatpush.msra.mxu0 0.0
  %881 = vmatpush.msra.mxu0 0.0
  %882 = vmatpush.msra.mxu0 0.0
  %883 = vmatpush.msra.mxu0 0.0
  %884 = vmatpush.msra.mxu0 0.0
  %885 = vmatpush.msra.mxu0 0.0
  %886 = vmatpush.msra.mxu0 0.0
  %887 = vmatpush.msra.mxu0 %v122
  %888 = vmatpush.msra.mxu0 %v121
  %889 = vmatpush.msra.mxu0 %v120
  %890 = vmatpush.msra.mxu0 %v119
  %891 = vmatmul.f32.gmra.mxu0 %v873
  %v892 = vpop.f32.mrf.mxu0
  %v893 = vadd.f32 0.0, %v892
  %894 = vdwg.mxu0
  %v895 = vadd.f32 %v868, %v893
  %v896 = vxor.u32 %v895, 2147483648
  %v897 = vmul.f32 %v896, 1.442695
  %v898 = vpow.pop %v897
  %v899 = vadd.f32 %v898, 1.0
  %v900 = vrcp.pop %v899
  %v901 = vmul.f32 %v899, %v900
  %v902 = vsub.f32 1.0, %v901
  %v903 = vmul.f32 %v900, %v902
  %v904 = vadd.f32 %v900, %v903
  %vm905 = vweird.f32 %v899
  %vm906 = vweird.f32 %v900
  %vm907 = vmor %vm905, %vm906
  %v908 = vsel %vm907, %v900, %v904
  %v909 = vand.u32 2147483647, %v899
  %vm910 = vcmp.eq.f32.partialorder %v909, 8.507059e+37
  %v911 = vand.u32 %v899, 2147483648
  %v912 = vor.u32 1.1754944e-38, %v911
  %v913 = vsel %vm910, %v912, %v908
  %v914 = vmul.f32 1.0, %v913
  %v915 = vtanh.pop %v895
  %v916 = vsel %vm132, %v915, %v914
  %v917 = vmul.f32 %v916, %v779
  %919 = vrot.lane.b32.xlu0 %v916, 64
  %v920 = vpop.permute.xlu0 %919
  %v922 = vmul.f32 %v916, %v920
  %924 = vrot.lane.b32.xlu0 %v922, 32
  %v925 = vpop.permute.xlu0 %924
  %v927 = vadd.f32 %v917, %v925
  %v928 = vtanh.pop %v927
  %930 = vrot.lane.b32.xlu0 %v928, 64
  %v931 = vpop.permute.xlu0 %930
  %v933 = vmul.f32 %v916, %v931
  %935 = vrot.lane.b32.xlu0 %v849, 32
  %v936 = vpop.permute.xlu0 %935
  %v937 = vsel %vm133, %v936, 0
  %939 = vmatpush.msra.mxu0 0.0
  %940 = vmatpush.msra.mxu0 0.0
  %941 = vmatpush.msra.mxu0 0.0
  %942 = vmatpush.msra.mxu0 0.0
  %943 = vmatpush.msra.mxu0 0.0
  %944 = vmatpush.msra.mxu0 0.0
  %945 = vmatpush.msra.mxu0 0.0
  %946 = vmatpush.msra.mxu0 0.0
  %947 = vmatpush.msra.mxu0 0.0
  %948 = vmatpush.msra.mxu0 0.0
  %949 = vmatpush.msra.mxu0 0.0
  %950 = vmatpush.msra.mxu0 0.0
  %951 = vmatpush.msra.mxu0 %v118
  %952 = vmatpush.msra.mxu0 %v117
  %953 = vmatpush.msra.mxu0 %v116
  %954 = vmatpush.msra.mxu0 %v115
  %955 = vmatmul.f32.gmra.mxu0 %v937
  %v956 = vpop.f32.mrf.mxu0
  %v957 = vadd.f32 0.0, %v956
  %958 = vdwg.mxu0
  %v959 = vadd.f32 %v110, %v957
  %v960 = vxor.u32 %v959, 2147483648
  %v961 = vmul.f32 %v960, 1.442695
  %v962 = vpow.pop %v961
  %v963 = vadd.f32 %v962, 1.0
  %v964 = vrcp.pop %v963
  %v965 = vmul.f32 %v963, %v964
  %v966 = vsub.f32 1.0, %v965
  %v967 = vmul.f32 %v964, %v966
  %v968 = vadd.f32 %v964, %v967
  %vm969 = vweird.f32 %v963
  %vm970 = vweird.f32 %v964
  %vm971 = vmor %vm969, %vm970
  %v972 = vsel %vm971, %v964, %v968
  %v973 = vand.u32 2147483647, %v963
  %vm974 = vcmp.eq.f32.partialorder %v973, 8.507059e+37
  %v975 = vand.u32 %v963, 2147483648
  %v976 = vor.u32 1.1754944e-38, %v975
  %v977 = vsel %vm974, %v976, %v972
  %v978 = vmul.f32 1.0, %v977
  %v979 = vtanh.pop %v959
  %v980 = vsel %vm132, %v979, %v978
  %v981 = vmul.f32 %v980, %v843
  %983 = vrot.lane.b32.xlu0 %v980, 64
  %v984 = vpop.permute.xlu0 %983
  %v986 = vmul.f32 %v980, %v984
  %988 = vrot.lane.b32.xlu0 %v986, 32
  %v989 = vpop.permute.xlu0 %988
  %v991 = vadd.f32 %v981, %v989
  %v992 = vtanh.pop %v991
  %994 = vrot.lane.b32.xlu0 %v992, 64
  %v995 = vpop.permute.xlu0 %994
  %v997 = vmul.f32 %v980, %v995
  %998 = vmatpush.msra.mxu0 0.0
  %999 = vmatpush.msra.mxu0 0.0
  %1000 = vmatpush.msra.mxu0 0.0
  %1001 = vmatpush.msra.mxu0 0.0
  %1002 = vmatpush.msra.mxu0 0.0
  %1003 = vmatpush.msra.mxu0 0.0
  %1004 = vmatpush.msra.mxu0 0.0
  %1005 = vmatpush.msra.mxu0 0.0
  %1006 = vmatpush.msra.mxu0 0.0
  %1007 = vmatpush.msra.mxu0 0.0
  %1008 = vmatpush.msra.mxu0 0.0
  %1009 = vmatpush.msra.mxu0 0.0
  %1010 = vmatpush.msra.mxu0 %v126
  %1011 = vmatpush.msra.mxu0 %v125
  %1012 = vmatpush.msra.mxu0 %v124
  %1013 = vmatpush.msra.mxu0 %v123
  %1014 = vmatmul.f32.gmra.mxu0 %v937
  %v1015 = vpop.f32.mrf.mxu0
  %v1016 = vadd.f32 %v261, %v1015
  %1017 = vdwg.mxu0
  %1019 = vrot.lane.b32.xlu0 %v933, 32
  %v1020 = vpop.permute.xlu0 %1019
  %v1021 = vsel %vm133, %v1020, 0
  %1023 = vmatpush.msra.mxu0 0.0
  %1024 = vmatpush.msra.mxu0 0.0
  %1025 = vmatpush.msra.mxu0 0.0
  %1026 = vmatpush.msra.mxu0 0.0
  %1027 = vmatpush.msra.mxu0 0.0
  %1028 = vmatpush.msra.mxu0 0.0
  %1029 = vmatpush.msra.mxu0 0.0
  %1030 = vmatpush.msra.mxu0 0.0
  %1031 = vmatpush.msra.mxu0 0.0
  %1032 = vmatpush.msra.mxu0 0.0
  %1033 = vmatpush.msra.mxu0 0.0
  %1034 = vmatpush.msra.mxu0 0.0
  %1035 = vmatpush.msra.mxu0 %v122
  %1036 = vmatpush.msra.mxu0 %v121
  %1037 = vmatpush.msra.mxu0 %v120
  %1038 = vmatpush.msra.mxu0 %v119
  %1039 = vmatmul.f32.gmra.mxu0 %v1021
  %v1040 = vpop.f32.mrf.mxu0
  %v1041 = vadd.f32 0.0, %v1040
  %1042 = vdwg.mxu0
  %v1043 = vadd.f32 %v1016, %v1041
  %v1044 = vxor.u32 %v1043, 2147483648
  %v1045 = vmul.f32 %v1044, 1.442695
  %v1046 = vpow.pop %v1045
  %v1047 = vadd.f32 %v1046, 1.0
  %v1048 = vrcp.pop %v1047
  %v1049 = vmul.f32 %v1047, %v1048
  %v1050 = vsub.f32 1.0, %v1049
  %v1051 = vmul.f32 %v1048, %v1050
  %v1052 = vadd.f32 %v1048, %v1051
  %vm1053 = vweird.f32 %v1047
  %vm1054 = vweird.f32 %v1048
  %vm1055 = vmor %vm1053, %vm1054
  %v1056 = vsel %vm1055, %v1048, %v1052
  %v1057 = vand.u32 2147483647, %v1047
  %vm1058 = vcmp.eq.f32.partialorder %v1057, 8.507059e+37
  %v1059 = vand.u32 %v1047, 2147483648
  %v1060 = vor.u32 1.1754944e-38, %v1059
  %v1061 = vsel %vm1058, %v1060, %v1056
  %v1062 = vmul.f32 1.0, %v1061
  %v1063 = vtanh.pop %v1043
  %v1064 = vsel %vm132, %v1063, %v1062
  %v1065 = vmul.f32 %v1064, %v927
  %1067 = vrot.lane.b32.xlu0 %v1064, 64
  %v1068 = vpop.permute.xlu0 %1067
  %v1070 = vmul.f32 %v1064, %v1068
  %1072 = vrot.lane.b32.xlu0 %v1070, 32
  %v1073 = vpop.permute.xlu0 %1072
  %v1075 = vadd.f32 %v1065, %v1073
  %v1076 = vtanh.pop %v1075
  %1078 = vrot.lane.b32.xlu0 %v1076, 64
  %v1079 = vpop.permute.xlu0 %1078
  %v1081 = vmul.f32 %v1064, %v1079
  %1083 = vrot.lane.b32.xlu0 %v997, 32
  %v1084 = vpop.permute.xlu0 %1083
  %v1085 = vsel %vm133, %v1084, 0
  %1087 = vmatpush.msra.mxu0 0.0
  %1088 = vmatpush.msra.mxu0 0.0
  %1089 = vmatpush.msra.mxu0 0.0
  %1090 = vmatpush.msra.mxu0 0.0
  %1091 = vmatpush.msra.mxu0 0.0
  %1092 = vmatpush.msra.mxu0 0.0
  %1093 = vmatpush.msra.mxu0 0.0
  %1094 = vmatpush.msra.mxu0 0.0
  %1095 = vmatpush.msra.mxu0 0.0
  %1096 = vmatpush.msra.mxu0 0.0
  %1097 = vmatpush.msra.mxu0 0.0
  %1098 = vmatpush.msra.mxu0 0.0
  %1099 = vmatpush.msra.mxu0 %v118
  %1100 = vmatpush.msra.mxu0 %v117
  %1101 = vmatpush.msra.mxu0 %v116
  %1102 = vmatpush.msra.mxu0 %v115
  %1103 = vmatmul.f32.gmra.mxu0 %v1085
  %v1104 = vpop.f32.mrf.mxu0
  %v1105 = vadd.f32 0.0, %v1104
  %1106 = vdwg.mxu0
  %v1107 = vadd.f32 %v113, %v1105
  %v1108 = vxor.u32 %v1107, 2147483648
  %v1109 = vmul.f32 %v1108, 1.442695
  %v1110 = vpow.pop %v1109
  %v1111 = vadd.f32 %v1110, 1.0
  %v1112 = vrcp.pop %v1111
  %v1113 = vmul.f32 %v1111, %v1112
  %v1114 = vsub.f32 1.0, %v1113
  %v1115 = vmul.f32 %v1112, %v1114
  %v1116 = vadd.f32 %v1112, %v1115
  %vm1117 = vweird.f32 %v1111
  %vm1118 = vweird.f32 %v1112
  %vm1119 = vmor %vm1117, %vm1118
  %v1120 = vsel %vm1119, %v1112, %v1116
  %v1121 = vand.u32 2147483647, %v1111
  %vm1122 = vcmp.eq.f32.partialorder %v1121, 8.507059e+37
  %v1123 = vand.u32 %v1111, 2147483648
  %v1124 = vor.u32 1.1754944e-38, %v1123
  %v1125 = vsel %vm1122, %v1124, %v1120
  %v1126 = vmul.f32 1.0, %v1125
  %v1127 = vtanh.pop %v1107
  %v1128 = vsel %vm132, %v1127, %v1126
  %v1129 = vmul.f32 %v1128, %v991
  %1131 = vrot.lane.b32.xlu0 %v1128, 64
  %v1132 = vpop.permute.xlu0 %1131
  %v1134 = vmul.f32 %v1128, %v1132
  %1136 = vrot.lane.b32.xlu0 %v1134, 32
  %v1137 = vpop.permute.xlu0 %1136
  %v1139 = vadd.f32 %v1129, %v1137
  %v1140 = vtanh.pop %v1139
  %1142 = vrot.lane.b32.xlu0 %v1140, 64
  %v1143 = vpop.permute.xlu0 %1142
  %v1145 = vmul.f32 %v1128, %v1143
  %1146 = vmatpush.msra.mxu0 0.0
  %1147 = vmatpush.msra.mxu0 0.0
  %1148 = vmatpush.msra.mxu0 0.0
  %1149 = vmatpush.msra.mxu0 0.0
  %1150 = vmatpush.msra.mxu0 0.0
  %1151 = vmatpush.msra.mxu0 0.0
  %1152 = vmatpush.msra.mxu0 0.0
  %1153 = vmatpush.msra.mxu0 0.0
  %1154 = vmatpush.msra.mxu0 0.0
  %1155 = vmatpush.msra.mxu0 0.0
  %1156 = vmatpush.msra.mxu0 0.0
  %1157 = vmatpush.msra.mxu0 0.0
  %1158 = vmatpush.msra.mxu0 %v126
  %1159 = vmatpush.msra.mxu0 %v125
  %1160 = vmatpush.msra.mxu0 %v124
  %1161 = vmatpush.msra.mxu0 %v123
  %1162 = vmatmul.f32.gmra.mxu0 %v1085
  %v1163 = vpop.f32.mrf.mxu0
  %v1164 = vadd.f32 %v261, %v1163
  %1165 = vdwg.mxu0
  %1167 = vrot.lane.b32.xlu0 %v1081, 32
  %v1168 = vpop.permute.xlu0 %1167
  %v1169 = vsel %vm133, %v1168, 0
  %1171 = vmatpush.msra.mxu0 0.0
  %1172 = vmatpush.msra.mxu0 0.0
  %1173 = vmatpush.msra.mxu0 0.0
  %1174 = vmatpush.msra.mxu0 0.0
  %1175 = vmatpush.msra.mxu0 0.0
  %1176 = vmatpush.msra.mxu0 0.0
  %1177 = vmatpush.msra.mxu0 0.0
  %1178 = vmatpush.msra.mxu0 0.0
  %1179 = vmatpush.msra.mxu0 0.0
  %1180 = vmatpush.msra.mxu0 0.0
  %1181 = vmatpush.msra.mxu0 0.0
  %1182 = vmatpush.msra.mxu0 0.0
  %1183 = vmatpush.msra.mxu0 %v122
  %1184 = vmatpush.msra.mxu0 %v121
  %1185 = vmatpush.msra.mxu0 %v120
  %1186 = vmatpush.msra.mxu0 %v119
  %1187 = vmatmul.f32.gmra.mxu0 %v1169
  %v1188 = vpop.f32.mrf.mxu0
  %v1189 = vadd.f32 0.0, %v1188
  %1190 = vdwg.mxu0
  %v1191 = vadd.f32 %v1164, %v1189
  %v1192 = vxor.u32 %v1191, 2147483648
  %v1193 = vmul.f32 %v1192, 1.442695
  %v1194 = vpow.pop %v1193
  %v1195 = vadd.f32 %v1194, 1.0
  %v1196 = vrcp.pop %v1195
  %v1197 = vmul.f32 %v1195, %v1196
  %v1198 = vsub.f32 1.0, %v1197
  %v1199 = vmul.f32 %v1196, %v1198
  %v1200 = vadd.f32 %v1196, %v1199
  %vm1201 = vweird.f32 %v1195
  %vm1202 = vweird.f32 %v1196
  %vm1203 = vmor %vm1201, %vm1202
  %v1204 = vsel %vm1203, %v1196, %v1200
  %v1205 = vand.u32 2147483647, %v1195
  %vm1206 = vcmp.eq.f32.partialorder %v1205, 8.507059e+37
  %v1207 = vand.u32 %v1195, 2147483648
  %v1208 = vor.u32 1.1754944e-38, %v1207
  %v1209 = vsel %vm1206, %v1208, %v1204
  %v1210 = vmul.f32 1.0, %v1209
  %v1211 = vtanh.pop %v1191
  %v1212 = vsel %vm132, %v1211, %v1210
  %v1213 = vmul.f32 %v1212, %v1075
  %1215 = vrot.lane.b32.xlu0 %v1212, 64
  %v1216 = vpop.permute.xlu0 %1215
  %v1218 = vmul.f32 %v1212, %v1216
  %1220 = vrot.lane.b32.xlu0 %v1218, 32
  %v1221 = vpop.permute.xlu0 %1220
  %v1223 = vadd.f32 %v1213, %v1221
  %v1224 = vtanh.pop %v1223
  %1226 = vrot.lane.b32.xlu0 %v1224, 64
  %v1227 = vpop.permute.xlu0 %1226
  %v1229 = vmul.f32 %v1212, %v1227
  %1231 = vrot.lane.b32.xlu0 %v1145, 32
  %v1232 = vpop.permute.xlu0 %1231
  %v1233 = vsel %vm133, %v1232, 0
  %1235 = vmatpush.msra.mxu0 0.0
  %1236 = vmatpush.msra.mxu0 0.0
  %1237 = vmatpush.msra.mxu0 0.0
  %1238 = vmatpush.msra.mxu0 0.0
  %1239 = vmatpush.msra.mxu0 0.0
  %1240 = vmatpush.msra.mxu0 0.0
  %1241 = vmatpush.msra.mxu0 0.0
  %1242 = vmatpush.msra.mxu0 0.0
  %1243 = vmatpush.msra.mxu0 0.0
  %1244 = vmatpush.msra.mxu0 0.0
  %1245 = vmatpush.msra.mxu0 0.0
  %1246 = vmatpush.msra.mxu0 0.0
  %1247 = vmatpush.msra.mxu0 %v126
  %1248 = vmatpush.msra.mxu0 %v125
  %1249 = vmatpush.msra.mxu0 %v124
  %1250 = vmatpush.msra.mxu0 %v123
  %1251 = vmatmul.f32.gmra.mxu0 %v1233
  %v1252 = vpop.f32.mrf.mxu0
  %v1253 = vadd.f32 %v261, %v1252
  %1254 = vdwg.mxu0
  %1256 = vrot.lane.b32.xlu0 %v1229, 32
  %v1257 = vpop.permute.xlu0 %1256
  %v1258 = vsel %vm133, %v1257, 0
  %1260 = vmatpush.msra.mxu0 0.0
  %1261 = vmatpush.msra.mxu0 0.0
  %1262 = vmatpush.msra.mxu0 0.0
  %1263 = vmatpush.msra.mxu0 0.0
  %1264 = vmatpush.msra.mxu0 0.0
  %1265 = vmatpush.msra.mxu0 0.0
  %1266 = vmatpush.msra.mxu0 0.0
  %1267 = vmatpush.msra.mxu0 0.0
  %1268 = vmatpush.msra.mxu0 0.0
  %1269 = vmatpush.msra.mxu0 0.0
  %1270 = vmatpush.msra.mxu0 0.0
  %1271 = vmatpush.msra.mxu0 0.0
  %1272 = vmatpush.msra.mxu0 %v122
  %1273 = vmatpush.msra.mxu0 %v121
  %1274 = vmatpush.msra.mxu0 %v120
  %1275 = vmatpush.msra.mxu0 %v119
  %1276 = vmatmul.f32.gmra.mxu0 %v1258
  %v1277 = vpop.f32.mrf.mxu0
  %v1278 = vadd.f32 0.0, %v1277
  %1279 = vdwg.mxu0
  %v1280 = vadd.f32 %v1253, %v1278
  %v1281 = vxor.u32 %v1280, 2147483648
  %v1282 = vmul.f32 %v1281, 1.442695
  %v1283 = vpow.pop %v1282
  %v1284 = vadd.f32 %v1283, 1.0
  %v1285 = vrcp.pop %v1284
  %v1286 = vmul.f32 %v1284, %v1285
  %v1287 = vsub.f32 1.0, %v1286
  %v1288 = vmul.f32 %v1285, %v1287
  %v1289 = vadd.f32 %v1285, %v1288
  %vm1290 = vweird.f32 %v1284
  %vm1291 = vweird.f32 %v1285
  %vm1292 = vmor %vm1290, %vm1291
  %v1293 = vsel %vm1292, %v1285, %v1289
  %v1294 = vand.u32 2147483647, %v1284
  %vm1295 = vcmp.eq.f32.partialorder %v1294, 8.507059e+37
  %v1296 = vand.u32 %v1284, 2147483648
  %v1297 = vor.u32 1.1754944e-38, %v1296
  %v1298 = vsel %vm1295, %v1297, %v1293
  %v1299 = vmul.f32 1.0, %v1298
  %v1300 = vtanh.pop %v1280
  %v1301 = vsel %vm132, %v1300, %v1299
  %v1302 = vmul.f32 %v1301, %v1223
  %1304 = vrot.lane.b32.xlu0 %v1301, 64
  %v1305 = vpop.permute.xlu0 %1304
  %v1307 = vmul.f32 %v1301, %v1305
  %1309 = vrot.lane.b32.xlu0 %v1307, 32
  %v1310 = vpop.permute.xlu0 %1309
  %v1312 = vadd.f32 %v1302, %v1310
  %v1313 = vtanh.pop %v1312
  %1315 = vrot.lane.b32.xlu0 %v1313, 64
  %v1316 = vpop.permute.xlu0 %1315
  %v1318 = vmul.f32 %v1301, %v1316
  %v1319 = vld [vmem:[%s7] sm:$0xff]
  %v1320 = vld [vmem:[%s7 + $0x8] sm:$0xff]
  %v1321 = vld [vmem:[%s7 + $0x10] sm:$0xff]
  %v1322 = vld [vmem:[%s7 + $0x18] sm:$0xff]
  %v1323 = vld [vmem:[%s8] sm:$0x1]
  %v1325 = vperm.slane %v1323, 0
  %1328 = vrot.lane.b32.xlu0 %v1318, 32
  %v1329 = vpop.permute.xlu0 %1328
  %v1330 = vsel %vm133, %v1329, 0
  %1332 = vmatpush.msra.mxu0 0.0
  %1333 = vmatpush.msra.mxu0 0.0
  %1334 = vmatpush.msra.mxu0 0.0
  %1335 = vmatpush.msra.mxu0 0.0
  %1336 = vmatpush.msra.mxu0 0.0
  %1337 = vmatpush.msra.mxu0 0.0
  %1338 = vmatpush.msra.mxu0 0.0
  %1339 = vmatpush.msra.mxu0 0.0
  %1340 = vmatpush.msra.mxu0 0.0
  %1341 = vmatpush.msra.mxu0 0.0
  %1342 = vmatpush.msra.mxu0 0.0
  %1343 = vmatpush.msra.mxu0 0.0
  %1344 = vmatpush.msra.mxu0 %v1322
  %1345 = vmatpush.msra.mxu0 %v1321
  %1346 = vmatpush.msra.mxu0 %v1320
  %1347 = vmatpush.msra.mxu0 %v1319
  %1348 = vmatmul.f32.gmra.mxu0 %v429
  %v1349 = vpop.f32.mrf.mxu0
  %v1350 = vadd.f32 %v1325, %v1349
  %1351 = vmatmul.f32.gmra.mxu0 %v577
  %v1352 = vpop.f32.mrf.mxu0
  %v1353 = vadd.f32 %v1325, %v1352
  %1354 = vmatmul.f32.gmra.mxu0 %v725
  %v1355 = vpop.f32.mrf.mxu0
  %v1356 = vadd.f32 %v1325, %v1355
  %1357 = vmatmul.f32.gmra.mxu0 %v873
  %v1358 = vpop.f32.mrf.mxu0
  %v1359 = vadd.f32 %v1325, %v1358
  %1360 = vmatmul.f32.gmra.mxu0 %v1021
  %v1361 = vpop.f32.mrf.mxu0
  %v1362 = vadd.f32 %v1325, %v1361
  %1363 = vmatmul.f32.gmra.mxu0 %v1169
  %v1364 = vpop.f32.mrf.mxu0
  %v1365 = vadd.f32 %v1325, %v1364
  %1366 = vmatmul.f32.gmra.mxu0 %v1258
  %v1367 = vpop.f32.mrf.mxu0
  %v1368 = vadd.f32 %v1325, %v1367
  %1369 = vmatmul.f32.gmra.mxu0 %v1330
  %v1370 = vpop.f32.mrf.mxu0
  %v1371 = vadd.f32 %v1325, %v1370
  %1372 = vdwg.mxu0
  %vm1373 = vcmask 15360
  %1374 = vst.msk [vmem:[%s9] sm:$0xff] %vm1373, %v1350
  %1375 = vst.msk [vmem:[%s9 + $0x8] sm:$0xff] %vm1373, %v1353
  %1376 = vst.msk [vmem:[%s9 + $0x10] sm:$0xff] %vm1373, %v1356
  %1377 = vst.msk [vmem:[%s9 + $0x18] sm:$0xff] %vm1373, %v1359
  %1378 = vst.msk [vmem:[%s9 + $0x20] sm:$0xff] %vm1373, %v1362
  %1379 = vst.msk [vmem:[%s9 + $0x28] sm:$0xff] %vm1373, %v1365
  %1380 = vst.msk [vmem:[%s9 + $0x30] sm:$0xff] %vm1373, %v1368
  %1381 = vst.msk [vmem:[%s9 + $0x38] sm:$0xff] %vm1373, %v1371
  // Predicated region
  $region38: #{lstm_trainer_forward.1} parent=0 // pred_check
    _
  $region39: #{lstm_trainer_forward.1} parent=0 // pred_check_branch
    %1383 = sbr.rel (0) target = $region41
  $region40: #{lstm_trainer_forward.1} parent=0 // pred_region
    _
  $region41: #{lstm_trainer_forward.1} parent=0 // pred_fallthru
    _
  // Predicated region
  $region42: #{lstm_trainer_forward.1} parent=0 // pred_check
    _
  $region43: #{lstm_trainer_forward.1} parent=0 // pred_check_branch
    %1385 = sbr.rel (0) target = $region45
  $region44: #{lstm_trainer_forward.1} parent=0 // pred_region
    _
  $region45: #{lstm_trainer_forward.1} parent=0 // pred_fallthru
    _

</llo_original>
